<compile_context>
chip_gen: v5e
topology: v5e:2x2
jax: 0.10.0
libtpu: 0.0.40
codegen_flags: <defaults>
</compile_context>

<pallas_src>
import jax
import jax.numpy as jnp
from jax.experimental import pallas as pl
from jax.experimental.pallas import tpu as pltpu

# ---- small synthetic ESM-style config -------------------------------------
VOCAB = 33          # ESM alphabet size
D = 32              # hidden size
NHEAD = 4
HDIM = D // NHEAD
FFN = 4 * D         # 128
NLAYERS = 2
S_TOK = 8           # BOS + 6 residues + EOS
EPS = 1e-5

WEIGHT_ORDER = ['ln1_g', 'ln1_b', 'wqkv', 'bqkv', 'wo', 'bo',
                'ln2_g', 'ln2_b', 'w1', 'b1', 'w2', 'b2', 'ln_f_g', 'ln_f_b']


def _layer_norm(x, g, b):
    mu = jnp.mean(x, axis=-1, keepdims=True)
    var = jnp.mean((x - mu) ** 2, axis=-1, keepdims=True)
    return (x - mu) * jax.lax.rsqrt(var + EPS) * g + b


# ---- fused Pallas kernel ----------------------------------------------------
def fused_encoder_kernel(x_ref,
                         ln1g_ref, ln1b_ref, wqkv_ref, bqkv_ref, wo_ref, bo_ref,
                         ln2g_ref, ln2b_ref, w1_ref, b1_ref, w2_ref, b2_ref,
                         lnfg_ref, lnfb_ref,
                         o_ref):
    x = x_ref[...]                         # (S, D) f32, one sequence per grid step
    s_len = x.shape[0]

    # Static unrolled layer loop; all layer weights VMEM-resident (toy size).
    # TODO(synk): at real ESM dims (D=1280, 33 layers) stream weights per layer
    # (grid axis over layers / double-buffered weight DMA), mandatory on v7x.
    for li in range(NLAYERS):
        # ---- pre-LN multi-head self-attention, fused QKV projection ----
        h = _layer_norm(x, ln1g_ref[li], ln1b_ref[li])
        qkv = jnp.dot(h.astype(jnp.bfloat16), wqkv_ref[li],
                      preferred_element_type=jnp.float32) + bqkv_ref[li]   # (S, 3D)
        # 1/sqrt(HDIM) is pre-folded into wq/bq, so no runtime q-scale.
        q = jnp.transpose(qkv[:, 0 * D:1 * D].reshape(s_len, NHEAD, HDIM),
                          (1, 0, 2))                                        # (H, S, HDIM)
        k = jnp.transpose(qkv[:, 1 * D:2 * D].reshape(s_len, NHEAD, HDIM),
                          (1, 0, 2))
        v = jnp.transpose(qkv[:, 2 * D:3 * D].reshape(s_len, NHEAD, HDIM),
                          (1, 0, 2))

        # Per-sequence scores: (H, S, S) -- no cross-sequence mask needed for
        # equal-length sequences.
        # TODO(synk): add a key-padding mask here (with a fully-masked-row
        # guard) before generalizing to ragged/variable-length batches.
        s = jnp.einsum('hqd,hkd->hqk',
                       q.astype(jnp.bfloat16), k.astype(jnp.bfloat16),
                       preferred_element_type=jnp.float32)
        s = s - jnp.max(s, axis=-1, keepdims=True)
        p = jnp.exp(s)                                                      # f32 softmax
        p = p * pl.reciprocal(jnp.sum(p, axis=-1, keepdims=True), approx=True)
        ctx = jnp.einsum('hqk,hkd->hqd',
                         p.astype(jnp.bfloat16), v.astype(jnp.bfloat16),
                         preferred_element_type=jnp.float32)                # (H, S, HDIM)

        # Concat heads -> lane-dense (S, D), single output-projection matmul.
        ctx = jnp.transpose(ctx, (1, 0, 2)).reshape(s_len, D)
        attn = jnp.dot(ctx.astype(jnp.bfloat16), wo_ref[li],
                       preferred_element_type=jnp.float32) + bo_ref[li]
        x = x + attn

        # ---- pre-LN feed-forward ----
        h2 = _layer_norm(x, ln2g_ref[li], ln2b_ref[li])
        f = jnp.dot(h2.astype(jnp.bfloat16), w1_ref[li],
                    preferred_element_type=jnp.float32) + b1_ref[li]
        f = jax.nn.gelu(f, approximate=True)  # TODO(synk): ESM uses exact erf-GELU
        f = jnp.dot(f.astype(jnp.bfloat16), w2_ref[li],
                    preferred_element_type=jnp.float32) + b2_ref[li]
        x = x + f

    # ---- final layer norm, lane-dense store ----
    o_ref[...] = _layer_norm(x, lnfg_ref[...], lnfb_ref[...])


# ---- wrapper ----------------------------------------------------------------
def _const_index_map(ndim):
    return lambda b: (0,) * ndim


def fused_encoder(x_emb, params):
    """x_emb: (B, S, D) f32 token embeddings -> (B, S, D) f32 representations."""
    B, S, Dm = x_emb.shape
    weights = [params[n] for n in WEIGHT_ORDER]
    # Weights: full-array VMEM blocks, same block index every grid step
    # (resident across the batch grid, no re-fetch).
    w_specs = [pl.BlockSpec(w.shape, _const_index_map(w.ndim)) for w in weights]
    seq_spec = pl.BlockSpec((None, S, Dm), lambda b: (b, 0, 0))
    return pl.pallas_call(
        fused_encoder_kernel,
        grid=(B,),
        out_shape=jax.ShapeDtypeStruct((B, S, Dm), jnp.float32),
        in_specs=[seq_spec] + w_specs,
        out_specs=seq_spec,
        compiler_params=pltpu.CompilerParams(
            dimension_semantics=("parallel",),   # megacore sharding on v7x
            vmem_limit_bytes=32 * 1024 * 1024,   # raise v5e's 16 MiB scoped default
        ),
    )(x_emb, *weights)


@jax.jit
def esm_forward(tokens, params):
    """tokens: (B, S) int32 -> last-layer representations (B, S, D) float32."""
    x = jnp.take(params['embed'], tokens, axis=0)   # glue: embedding gather
    return fused_encoder(x, params)


# ---- deterministic parameter init (QKV fused, scale folded, bf16 weights) ---
def init_params(key):
    keys = jax.random.split(key, 7)
    zeros = lambda *s: jnp.zeros(s, jnp.float32)
    ones = lambda *s: jnp.ones(s, jnp.float32)
    rnd = lambda k, *s: jax.random.normal(k, s, jnp.float32) * 0.05
    scale = 1.0 / (HDIM ** 0.5)

    # Per-head weights packed along the output (lane) dim: columns of wq are
    # [head0 | head1 | ...]; wo rows are the matching concat of per-head rows.
    wq = rnd(keys[1], NLAYERS, D, D) * scale        # fold 1/sqrt(HDIM) at init
    wk = rnd(keys[2], NLAYERS, D, D)
    wv = rnd(keys[3], NLAYERS, D, D)
    wqkv = jnp.concatenate([wq, wk, wv], axis=-1)   # (L, D, 3D)
    bqkv = zeros(NLAYERS, 1, 3 * D)                 # q-bias portion scaled too (zero)

    return {
        'embed': jax.random.normal(keys[0], (VOCAB, D), jnp.float32) * 0.02,
        'ln1_g': ones(NLAYERS, 1, D), 'ln1_b': zeros(NLAYERS, 1, D),
        'wqkv': wqkv.astype(jnp.bfloat16),          # bf16 MXU operands
        'bqkv': bqkv,
        'wo': rnd(keys[4], NLAYERS, D, D).astype(jnp.bfloat16),
        'bo': zeros(NLAYERS, 1, D),
        'ln2_g': ones(NLAYERS, 1, D), 'ln2_b': zeros(NLAYERS, 1, D),
        'w1': rnd(keys[5], NLAYERS, D, FFN).astype(jnp.bfloat16),
        'b1': zeros(NLAYERS, 1, FFN),
        'w2': rnd(keys[6], NLAYERS, FFN, D).astype(jnp.bfloat16),
        'b2': zeros(NLAYERS, 1, D),
        'ln_f_g': ones(1, D), 'ln_f_b': zeros(1, D),
    }


# ---- main -------------------------------------------------------------------
if __name__ == "__main__":
    key = jax.random.PRNGKey(0)
    pkey, dkey = jax.random.split(key)
    params = init_params(pkey)

    # Synthetic "raw_data": pdb -> chain -> {pre-tokenized seq, residue mask}.
    # TODO(synk): ESM alphabet/string tokenization has no Pallas equivalent;
    # we feed pre-tokenized integer sequences directly.
    L = S_TOK - 2
    tk1, tk2 = jax.random.split(dkey)
    raw_data = {
        '1abc': {
            'A': {'toks': jax.random.randint(tk1, (L,), 4, VOCAB - 4),
                  'mask': jnp.array([1, 1, 0, 1, 1, 1], dtype=jnp.int32)},
            'B': {'toks': jax.random.randint(tk2, (L,), 4, VOCAB - 4),
                  'mask': jnp.array([1, 0, 1, 1, 1, 0], dtype=jnp.int32)},
        }
    }
    truncation_seq_length = 2046

    # Batch conversion (mimics ESM batch converter: BOS=0 ... EOS=2).
    labels, tok_rows, masks = [], [], []
    for pdb_name, chains in raw_data.items():
        for chain_id, cdata in chains.items():
            labels.append((pdb_name, chain_id))
            row = jnp.concatenate([jnp.array([0], jnp.int32),
                                   cdata['toks'].astype(jnp.int32),
                                   jnp.array([2], jnp.int32)])
            tok_rows.append(row)
            masks.append(cdata['mask'])
    toks = jnp.stack(tok_rows)                                  # (B=2, S_TOK=8)

    reps = jax.block_until_ready(esm_forward(toks, params))     # (2, 8, 32)

    # Per-chain masked extraction (drop BOS, apply mask), concat per pdb.
    per_chain = {}
    for i, (pdb_name, chain_id) in enumerate(labels):
        mask = masks[i]
        trunc = min(truncation_seq_length, mask.shape[0])
        emb = reps[i, 1:trunc + 1][mask[:trunc].astype(bool)]
        per_chain.setdefault(pdb_name, {})[chain_id] = emb
    concat_embs = {pdb: jnp.concatenate(list(ch.values()), axis=0)
                   for pdb, ch in per_chain.items()}

    for pdb, emb in concat_embs.items():
        emb = jax.block_until_ready(emb)
        assert emb.ndim == 2 and emb.shape[1] == D, emb.shape
        assert bool(jnp.all(jnp.isfinite(emb))), "non-finite embeddings"
    print("KERNEL_OK")
</pallas_src>

<mosaic_0001>
module attributes {stable_mosaic.version = 11 : i64} {
  func.func @fused_encoder_kernel(%arg0: i32, %arg1: memref<1x8x32xf32, #tpu.memory_space<vmem>>, %arg2: memref<2x1x32xf32, #tpu.memory_space<vmem>>, %arg3: memref<2x1x32xf32, #tpu.memory_space<vmem>>, %arg4: memref<2x32x96xbf16, #tpu.memory_space<vmem>>, %arg5: memref<2x1x96xf32, #tpu.memory_space<vmem>>, %arg6: memref<2x32x32xbf16, #tpu.memory_space<vmem>>, %arg7: memref<2x1x32xf32, #tpu.memory_space<vmem>>, %arg8: memref<2x1x32xf32, #tpu.memory_space<vmem>>, %arg9: memref<2x1x32xf32, #tpu.memory_space<vmem>>, %arg10: memref<2x32x128xbf16, #tpu.memory_space<vmem>>, %arg11: memref<2x1x128xf32, #tpu.memory_space<vmem>>, %arg12: memref<2x128x32xbf16, #tpu.memory_space<vmem>>, %arg13: memref<2x1x32xf32, #tpu.memory_space<vmem>>, %arg14: memref<1x32xf32, #tpu.memory_space<vmem>>, %arg15: memref<1x32xf32, #tpu.memory_space<vmem>>, %arg16: memref<1x8x32xf32, #tpu.memory_space<vmem>>) attributes {dimension_semantics = [#tpu.dimension_semantics<parallel>], iteration_bounds = array<i64: 2>, scalar_prefetch = 0 : i64, scratch_operands = 0 : i64, tpu.core_type = #tpu.core_type<tc>, window_params = [{transform_indices = @transform_0, window_bounds = array<i64: 1, 8, 32>}, {pipeline_mode = #tpu.pipeline_mode<synchronous>, transform_indices = @transform_1, window_bounds = array<i64: 2, 1, 32>}, {pipeline_mode = #tpu.pipeline_mode<synchronous>, transform_indices = @transform_2, window_bounds = array<i64: 2, 1, 32>}, {pipeline_mode = #tpu.pipeline_mode<synchronous>, transform_indices = @transform_3, window_bounds = array<i64: 2, 32, 96>}, {pipeline_mode = #tpu.pipeline_mode<synchronous>, transform_indices = @transform_4, window_bounds = array<i64: 2, 1, 96>}, {pipeline_mode = #tpu.pipeline_mode<synchronous>, transform_indices = @transform_5, window_bounds = array<i64: 2, 32, 32>}, {pipeline_mode = #tpu.pipeline_mode<synchronous>, transform_indices = @transform_6, window_bounds = array<i64: 2, 1, 32>}, {pipeline_mode = #tpu.pipeline_mode<synchronous>, transform_indices = @transform_7, window_bounds = array<i64: 2, 1, 32>}, {pipeline_mode = #tpu.pipeline_mode<synchronous>, transform_indices = @transform_8, window_bounds = array<i64: 2, 1, 32>}, {pipeline_mode = #tpu.pipeline_mode<synchronous>, transform_indices = @transform_9, window_bounds = array<i64: 2, 32, 128>}, {pipeline_mode = #tpu.pipeline_mode<synchronous>, transform_indices = @transform_10, window_bounds = array<i64: 2, 1, 128>}, {pipeline_mode = #tpu.pipeline_mode<synchronous>, transform_indices = @transform_11, window_bounds = array<i64: 2, 128, 32>}, {pipeline_mode = #tpu.pipeline_mode<synchronous>, transform_indices = @transform_12, window_bounds = array<i64: 2, 1, 32>}, {pipeline_mode = #tpu.pipeline_mode<synchronous>, transform_indices = @transform_13, window_bounds = array<i64: 1, 32>}, {pipeline_mode = #tpu.pipeline_mode<synchronous>, transform_indices = @transform_14, window_bounds = array<i64: 1, 32>}, {transform_indices = @transform_15, window_bounds = array<i64: 1, 8, 32>}]} {
    %c0 = arith.constant 0 : index
    %c0_0 = arith.constant 0 : index
    %c0_1 = arith.constant 0 : index
    %0 = vector.load %arg1[%c0, %c0_0, %c0_1] : memref<1x8x32xf32, #tpu.memory_space<vmem>>, vector<1x8x32xf32>
    %1 = vector.shape_cast %0 : vector<1x8x32xf32> to vector<8x32xf32>
    %c0_2 = arith.constant 0 : index
    %c0_3 = arith.constant 0 : index
    %c0_4 = arith.constant 0 : index
    %2 = vector.load %arg2[%c0_2, %c0_3, %c0_4] : memref<2x1x32xf32, #tpu.memory_space<vmem>>, vector<1x1x32xf32>
    %3 = vector.shape_cast %2 : vector<1x1x32xf32> to vector<1x32xf32>
    %c0_5 = arith.constant 0 : index
    %c0_6 = arith.constant 0 : index
    %c0_7 = arith.constant 0 : index
    %4 = vector.load %arg3[%c0_5, %c0_6, %c0_7] : memref<2x1x32xf32, #tpu.memory_space<vmem>>, vector<1x1x32xf32>
    %5 = vector.shape_cast %4 : vector<1x1x32xf32> to vector<1x32xf32>
    %cst = arith.constant dense<0.000000e+00> : vector<8xf32>
    %6 = vector.multi_reduction <add>, %1, %cst [1] : vector<8x32xf32> to vector<8xf32>
    %7 = vector.shape_cast %6 : vector<8xf32> to vector<8x1xf32>
    %cst_8 = arith.constant 3.200000e+01 : f32
    %8 = vector.broadcast %cst_8 : f32 to vector<8x1xf32>
    %9 = arith.divf %7, %8 : vector<8x1xf32>
    %10 = vector.broadcast %9 : vector<8x1xf32> to vector<8x32xf32>
    %11 = arith.subf %1, %10 : vector<8x32xf32>
    %12 = arith.mulf %11, %11 : vector<8x32xf32>
    %cst_9 = arith.constant dense<0.000000e+00> : vector<8xf32>
    %13 = vector.multi_reduction <add>, %12, %cst_9 [1] : vector<8x32xf32> to vector<8xf32>
    %14 = vector.shape_cast %13 : vector<8xf32> to vector<8x1xf32>
    %cst_10 = arith.constant 3.200000e+01 : f32
    %15 = vector.broadcast %cst_10 : f32 to vector<8x1xf32>
    %16 = arith.divf %14, %15 : vector<8x1xf32>
    %17 = vector.broadcast %9 : vector<8x1xf32> to vector<8x32xf32>
    %18 = arith.subf %1, %17 : vector<8x32xf32>
    %cst_11 = arith.constant 9.99999974E-6 : f32
    %19 = vector.broadcast %cst_11 : f32 to vector<8x1xf32>
    %20 = arith.addf %16, %19 : vector<8x1xf32>
    %21 = math.rsqrt %20 : vector<8x1xf32>
    %22 = vector.broadcast %21 : vector<8x1xf32> to vector<8x32xf32>
    %23 = arith.mulf %18, %22 : vector<8x32xf32>
    %24 = vector.broadcast %3 : vector<1x32xf32> to vector<8x32xf32>
    %25 = arith.mulf %23, %24 : vector<8x32xf32>
    %26 = vector.broadcast %5 : vector<1x32xf32> to vector<8x32xf32>
    %27 = arith.addf %25, %26 : vector<8x32xf32>
    %28 = arith.truncf %27 : vector<8x32xf32> to vector<8x32xbf16>
    %c0_12 = arith.constant 0 : index
    %c0_13 = arith.constant 0 : index
    %c0_14 = arith.constant 0 : index
    %29 = vector.load %arg4[%c0_12, %c0_13, %c0_14] : memref<2x32x96xbf16, #tpu.memory_space<vmem>>, vector<1x32x96xbf16>
    %30 = vector.shape_cast %29 : vector<1x32x96xbf16> to vector<32x96xbf16>
    %cst_15 = arith.constant dense<0.000000e+00> : vector<8x96xf32>
    %31 = tpu.matmul %28, %30, %cst_15 {dimension_numbers = #tpu.dot_dimension_numbers<[1], [0], [0], [1], [0, 0, 1, 1], [], []>} : vector<8x32xbf16>, vector<32x96xbf16>, vector<8x96xf32> -> vector<8x96xf32>
    %c0_16 = arith.constant 0 : index
    %c0_17 = arith.constant 0 : index
    %c0_18 = arith.constant 0 : index
    %32 = vector.load %arg5[%c0_16, %c0_17, %c0_18] : memref<2x1x96xf32, #tpu.memory_space<vmem>>, vector<1x1x96xf32>
    %33 = vector.shape_cast %32 : vector<1x1x96xf32> to vector<1x96xf32>
    %34 = vector.broadcast %33 : vector<1x96xf32> to vector<8x96xf32>
    %35 = arith.addf %31, %34 : vector<8x96xf32>
    %36 = vector.extract_strided_slice %35 {offsets = [0, 0], sizes = [8, 32], strides = [1, 1]} : vector<8x96xf32> to vector<8x32xf32>
    %37 = vector.shape_cast %36 : vector<8x32xf32> to vector<8x4x8xf32>
    %38 = tpu.transpose %37, [1, 0, 2] : vector<8x4x8xf32> -> vector<4x8x8xf32>
    %39 = vector.extract_strided_slice %35 {offsets = [0, 32], sizes = [8, 32], strides = [1, 1]} : vector<8x96xf32> to vector<8x32xf32>
    %40 = vector.shape_cast %39 : vector<8x32xf32> to vector<8x4x8xf32>
    %41 = tpu.transpose %40, [1, 0, 2] : vector<8x4x8xf32> -> vector<4x8x8xf32>
    %42 = vector.extract_strided_slice %35 {offsets = [0, 64], sizes = [8, 32], strides = [1, 1]} : vector<8x96xf32> to vector<8x32xf32>
    %43 = vector.shape_cast %42 : vector<8x32xf32> to vector<8x4x8xf32>
    %44 = tpu.transpose %43, [1, 0, 2] : vector<8x4x8xf32> -> vector<4x8x8xf32>
    %45 = arith.truncf %38 : vector<4x8x8xf32> to vector<4x8x8xbf16>
    %46 = arith.truncf %41 : vector<4x8x8xf32> to vector<4x8x8xbf16>
    "tpu.trace_start"() <{level = 10 : i32, message = "hqd,hkd->hqk"}> : () -> ()
    %cst_19 = arith.constant dense<0.000000e+00> : vector<4x8x8xf32>
    %47 = tpu.matmul %45, %46, %cst_19 {dimension_numbers = #tpu.dot_dimension_numbers<[2], [2], [1], [1], [0, 0, 0, 1, 1, 1], [0], [0]>} : vector<4x8x8xbf16>, vector<4x8x8xbf16>, vector<4x8x8xf32> -> vector<4x8x8xf32>
    "tpu.trace_stop"() : () -> ()
    %cst_20 = arith.constant dense<0xFF800000> : vector<4x8xf32>
    %48 = vector.multi_reduction <maximumf>, %47, %cst_20 [2] : vector<4x8x8xf32> to vector<4x8xf32>
    %49 = vector.shape_cast %48 : vector<4x8xf32> to vector<4x8x1xf32>
    %50 = vector.broadcast %49 : vector<4x8x1xf32> to vector<4x8x8xf32>
    %51 = arith.subf %47, %50 : vector<4x8x8xf32>
    %52 = math.exp %51 : vector<4x8x8xf32>
    %cst_21 = arith.constant dense<0.000000e+00> : vector<4x8xf32>
    %53 = vector.multi_reduction <add>, %52, %cst_21 [2] : vector<4x8x8xf32> to vector<4x8xf32>
    %54 = vector.shape_cast %53 : vector<4x8xf32> to vector<4x8x1xf32>
    %55 = tpu.reciprocal %54 {approx = true} : vector<4x8x1xf32> -> vector<4x8x1xf32>
    %56 = vector.broadcast %55 : vector<4x8x1xf32> to vector<4x8x8xf32>
    %57 = arith.mulf %52, %56 : vector<4x8x8xf32>
    %58 = arith.truncf %57 : vector<4x8x8xf32> to vector<4x8x8xbf16>
    %59 = arith.truncf %44 : vector<4x8x8xf32> to vector<4x8x8xbf16>
    "tpu.trace_start"() <{level = 10 : i32, message = "hqk,hkd->hqd"}> : () -> ()
    %cst_22 = arith.constant dense<0.000000e+00> : vector<4x8x8xf32>
    %60 = tpu.matmul %58, %59, %cst_22 {dimension_numbers = #tpu.dot_dimension_numbers<[2], [1], [1], [2], [0, 0, 0, 1, 1, 2], [0], [0]>} : vector<4x8x8xbf16>, vector<4x8x8xbf16>, vector<4x8x8xf32> -> vector<4x8x8xf32>
    "tpu.trace_stop"() : () -> ()
    %61 = tpu.transpose %60, [1, 0, 2] : vector<4x8x8xf32> -> vector<8x4x8xf32>
    %62 = vector.shape_cast %61 : vector<8x4x8xf32> to vector<8x32xf32>
    %63 = arith.truncf %62 : vector<8x32xf32> to vector<8x32xbf16>
    %c0_23 = arith.constant 0 : index
    %c0_24 = arith.constant 0 : index
    %c0_25 = arith.constant 0 : index
    %64 = vector.load %arg6[%c0_23, %c0_24, %c0_25] : memref<2x32x32xbf16, #tpu.memory_space<vmem>>, vector<1x32x32xbf16>
    %65 = vector.shape_cast %64 : vector<1x32x32xbf16> to vector<32x32xbf16>
    %cst_26 = arith.constant dense<0.000000e+00> : vector<8x32xf32>
    %66 = tpu.matmul %63, %65, %cst_26 {dimension_numbers = #tpu.dot_dimension_numbers<[1], [0], [0], [1], [0, 0, 1, 1], [], []>} : vector<8x32xbf16>, vector<32x32xbf16>, vector<8x32xf32> -> vector<8x32xf32>
    %c0_27 = arith.constant 0 : index
    %c0_28 = arith.constant 0 : index
    %c0_29 = arith.constant 0 : index
    %67 = vector.load %arg7[%c0_27, %c0_28, %c0_29] : memref<2x1x32xf32, #tpu.memory_space<vmem>>, vector<1x1x32xf32>
    %68 = vector.shape_cast %67 : vector<1x1x32xf32> to vector<1x32xf32>
    %69 = vector.broadcast %68 : vector<1x32xf32> to vector<8x32xf32>
    %70 = arith.addf %66, %69 : vector<8x32xf32>
    %71 = arith.addf %1, %70 : vector<8x32xf32>
    %c0_30 = arith.constant 0 : index
    %c0_31 = arith.constant 0 : index
    %c0_32 = arith.constant 0 : index
    %72 = vector.load %arg8[%c0_30, %c0_31, %c0_32] : memref<2x1x32xf32, #tpu.memory_space<vmem>>, vector<1x1x32xf32>
    %73 = vector.shape_cast %72 : vector<1x1x32xf32> to vector<1x32xf32>
    %c0_33 = arith.constant 0 : index
    %c0_34 = arith.constant 0 : index
    %c0_35 = arith.constant 0 : index
    %74 = vector.load %arg9[%c0_33, %c0_34, %c0_35] : memref<2x1x32xf32, #tpu.memory_space<vmem>>, vector<1x1x32xf32>
    %75 = vector.shape_cast %74 : vector<1x1x32xf32> to vector<1x32xf32>
    %cst_36 = arith.constant dense<0.000000e+00> : vector<8xf32>
    %76 = vector.multi_reduction <add>, %71, %cst_36 [1] : vector<8x32xf32> to vector<8xf32>
    %77 = vector.shape_cast %76 : vector<8xf32> to vector<8x1xf32>
    %cst_37 = arith.constant 3.200000e+01 : f32
    %78 = vector.broadcast %cst_37 : f32 to vector<8x1xf32>
    %79 = arith.divf %77, %78 : vector<8x1xf32>
    %80 = vector.broadcast %79 : vector<8x1xf32> to vector<8x32xf32>
    %81 = arith.subf %71, %80 : vector<8x32xf32>
    %82 = arith.mulf %81, %81 : vector<8x32xf32>
    %cst_38 = arith.constant dense<0.000000e+00> : vector<8xf32>
    %83 = vector.multi_reduction <add>, %82, %cst_38 [1] : vector<8x32xf32> to vector<8xf32>
    %84 = vector.shape_cast %83 : vector<8xf32> to vector<8x1xf32>
    %cst_39 = arith.constant 3.200000e+01 : f32
    %85 = vector.broadcast %cst_39 : f32 to vector<8x1xf32>
    %86 = arith.divf %84, %85 : vector<8x1xf32>
    %87 = vector.broadcast %79 : vector<8x1xf32> to vector<8x32xf32>
    %88 = arith.subf %71, %87 : vector<8x32xf32>
    %cst_40 = arith.constant 9.99999974E-6 : f32
    %89 = vector.broadcast %cst_40 : f32 to vector<8x1xf32>
    %90 = arith.addf %86, %89 : vector<8x1xf32>
    %91 = math.rsqrt %90 : vector<8x1xf32>
    %92 = vector.broadcast %91 : vector<8x1xf32> to vector<8x32xf32>
    %93 = arith.mulf %88, %92 : vector<8x32xf32>
    %94 = vector.broadcast %73 : vector<1x32xf32> to vector<8x32xf32>
    %95 = arith.mulf %93, %94 : vector<8x32xf32>
    %96 = vector.broadcast %75 : vector<1x32xf32> to vector<8x32xf32>
    %97 = arith.addf %95, %96 : vector<8x32xf32>
    %98 = arith.truncf %97 : vector<8x32xf32> to vector<8x32xbf16>
    %c0_41 = arith.constant 0 : index
    %c0_42 = arith.constant 0 : index
    %c0_43 = arith.constant 0 : index
    %99 = vector.load %arg10[%c0_41, %c0_42, %c0_43] : memref<2x32x128xbf16, #tpu.memory_space<vmem>>, vector<1x32x128xbf16>
    %100 = vector.shape_cast %99 : vector<1x32x128xbf16> to vector<32x128xbf16>
    %cst_44 = arith.constant dense<0.000000e+00> : vector<8x128xf32>
    %101 = tpu.matmul %98, %100, %cst_44 {dimension_numbers = #tpu.dot_dimension_numbers<[1], [0], [0], [1], [0, 0, 1, 1], [], []>} : vector<8x32xbf16>, vector<32x128xbf16>, vector<8x128xf32> -> vector<8x128xf32>
    %c0_45 = arith.constant 0 : index
    %c0_46 = arith.constant 0 : index
    %c0_47 = arith.constant 0 : index
    %102 = vector.load %arg11[%c0_45, %c0_46, %c0_47] : memref<2x1x128xf32, #tpu.memory_space<vmem>>, vector<1x1x128xf32>
    %103 = vector.shape_cast %102 : vector<1x1x128xf32> to vector<1x128xf32>
    %104 = vector.broadcast %103 : vector<1x128xf32> to vector<8x128xf32>
    %105 = arith.addf %101, %104 : vector<8x128xf32>
    %106 = arith.mulf %105, %105 : vector<8x128xf32>
    %107 = arith.mulf %105, %106 : vector<8x128xf32>
    %cst_48 = arith.constant 4.471500e-02 : f32
    %108 = vector.broadcast %cst_48 : f32 to vector<8x128xf32>
    %109 = arith.mulf %108, %107 : vector<8x128xf32>
    %110 = arith.addf %105, %109 : vector<8x128xf32>
    %cst_49 = arith.constant 0.797884583 : f32
    %111 = vector.broadcast %cst_49 : f32 to vector<8x128xf32>
    %112 = arith.mulf %111, %110 : vector<8x128xf32>
    %113 = math.tanh %112 : vector<8x128xf32>
    %cst_50 = arith.constant 1.000000e+00 : f32
    %114 = vector.broadcast %cst_50 : f32 to vector<8x128xf32>
    %115 = arith.addf %114, %113 : vector<8x128xf32>
    %cst_51 = arith.constant 5.000000e-01 : f32
    %116 = vector.broadcast %cst_51 : f32 to vector<8x128xf32>
    %117 = arith.mulf %116, %115 : vector<8x128xf32>
    %118 = arith.mulf %105, %117 : vector<8x128xf32>
    %119 = arith.truncf %118 : vector<8x128xf32> to vector<8x128xbf16>
    %c0_52 = arith.constant 0 : index
    %c0_53 = arith.constant 0 : index
    %c0_54 = arith.constant 0 : index
    %120 = vector.load %arg12[%c0_52, %c0_53, %c0_54] : memref<2x128x32xbf16, #tpu.memory_space<vmem>>, vector<1x128x32xbf16>
    %121 = vector.shape_cast %120 : vector<1x128x32xbf16> to vector<128x32xbf16>
    %cst_55 = arith.constant dense<0.000000e+00> : vector<8x32xf32>
    %122 = tpu.matmul %119, %121, %cst_55 {dimension_numbers = #tpu.dot_dimension_numbers<[1], [0], [0], [1], [0, 0, 1, 1], [], []>} : vector<8x128xbf16>, vector<128x32xbf16>, vector<8x32xf32> -> vector<8x32xf32>
    %c0_56 = arith.constant 0 : index
    %c0_57 = arith.constant 0 : index
    %c0_58 = arith.constant 0 : index
    %123 = vector.load %arg13[%c0_56, %c0_57, %c0_58] : memref<2x1x32xf32, #tpu.memory_space<vmem>>, vector<1x1x32xf32>
    %124 = vector.shape_cast %123 : vector<1x1x32xf32> to vector<1x32xf32>
    %125 = vector.broadcast %124 : vector<1x32xf32> to vector<8x32xf32>
    %126 = arith.addf %122, %125 : vector<8x32xf32>
    %127 = arith.addf %71, %126 : vector<8x32xf32>
    %c1 = arith.constant 1 : index
    %c0_59 = arith.constant 0 : index
    %c0_60 = arith.constant 0 : index
    %128 = vector.load %arg2[%c1, %c0_59, %c0_60] : memref<2x1x32xf32, #tpu.memory_space<vmem>>, vector<1x1x32xf32>
    %129 = vector.shape_cast %128 : vector<1x1x32xf32> to vector<1x32xf32>
    %c1_61 = arith.constant 1 : index
    %c0_62 = arith.constant 0 : index
    %c0_63 = arith.constant 0 : index
    %130 = vector.load %arg3[%c1_61, %c0_62, %c0_63] : memref<2x1x32xf32, #tpu.memory_space<vmem>>, vector<1x1x32xf32>
    %131 = vector.shape_cast %130 : vector<1x1x32xf32> to vector<1x32xf32>
    %cst_64 = arith.constant dense<0.000000e+00> : vector<8xf32>
    %132 = vector.multi_reduction <add>, %127, %cst_64 [1] : vector<8x32xf32> to vector<8xf32>
    %133 = vector.shape_cast %132 : vector<8xf32> to vector<8x1xf32>
    %cst_65 = arith.constant 3.200000e+01 : f32
    %134 = vector.broadcast %cst_65 : f32 to vector<8x1xf32>
    %135 = arith.divf %133, %134 : vector<8x1xf32>
    %136 = vector.broadcast %135 : vector<8x1xf32> to vector<8x32xf32>
    %137 = arith.subf %127, %136 : vector<8x32xf32>
    %138 = arith.mulf %137, %137 : vector<8x32xf32>
    %cst_66 = arith.constant dense<0.000000e+00> : vector<8xf32>
    %139 = vector.multi_reduction <add>, %138, %cst_66 [1] : vector<8x32xf32> to vector<8xf32>
    %140 = vector.shape_cast %139 : vector<8xf32> to vector<8x1xf32>
    %cst_67 = arith.constant 3.200000e+01 : f32
    %141 = vector.broadcast %cst_67 : f32 to vector<8x1xf32>
    %142 = arith.divf %140, %141 : vector<8x1xf32>
    %143 = vector.broadcast %135 : vector<8x1xf32> to vector<8x32xf32>
    %144 = arith.subf %127, %143 : vector<8x32xf32>
    %cst_68 = arith.constant 9.99999974E-6 : f32
    %145 = vector.broadcast %cst_68 : f32 to vector<8x1xf32>
    %146 = arith.addf %142, %145 : vector<8x1xf32>
    %147 = math.rsqrt %146 : vector<8x1xf32>
    %148 = vector.broadcast %147 : vector<8x1xf32> to vector<8x32xf32>
    %149 = arith.mulf %144, %148 : vector<8x32xf32>
    %150 = vector.broadcast %129 : vector<1x32xf32> to vector<8x32xf32>
    %151 = arith.mulf %149, %150 : vector<8x32xf32>
    %152 = vector.broadcast %131 : vector<1x32xf32> to vector<8x32xf32>
    %153 = arith.addf %151, %152 : vector<8x32xf32>
    %154 = arith.truncf %153 : vector<8x32xf32> to vector<8x32xbf16>
    %c1_69 = arith.constant 1 : index
    %c0_70 = arith.constant 0 : index
    %c0_71 = arith.constant 0 : index
    %155 = vector.load %arg4[%c1_69, %c0_70, %c0_71] : memref<2x32x96xbf16, #tpu.memory_space<vmem>>, vector<1x32x96xbf16>
    %156 = vector.shape_cast %155 : vector<1x32x96xbf16> to vector<32x96xbf16>
    %cst_72 = arith.constant dense<0.000000e+00> : vector<8x96xf32>
    %157 = tpu.matmul %154, %156, %cst_72 {dimension_numbers = #tpu.dot_dimension_numbers<[1], [0], [0], [1], [0, 0, 1, 1], [], []>} : vector<8x32xbf16>, vector<32x96xbf16>, vector<8x96xf32> -> vector<8x96xf32>
    %c1_73 = arith.constant 1 : index
    %c0_74 = arith.constant 0 : index
    %c0_75 = arith.constant 0 : index
    %158 = vector.load %arg5[%c1_73, %c0_74, %c0_75] : memref<2x1x96xf32, #tpu.memory_space<vmem>>, vector<1x1x96xf32>
    %159 = vector.shape_cast %158 : vector<1x1x96xf32> to vector<1x96xf32>
    %160 = vector.broadcast %159 : vector<1x96xf32> to vector<8x96xf32>
    %161 = arith.addf %157, %160 : vector<8x96xf32>
    %162 = vector.extract_strided_slice %161 {offsets = [0, 0], sizes = [8, 32], strides = [1, 1]} : vector<8x96xf32> to vector<8x32xf32>
    %163 = vector.shape_cast %162 : vector<8x32xf32> to vector<8x4x8xf32>
    %164 = tpu.transpose %163, [1, 0, 2] : vector<8x4x8xf32> -> vector<4x8x8xf32>
    %165 = vector.extract_strided_slice %161 {offsets = [0, 32], sizes = [8, 32], strides = [1, 1]} : vector<8x96xf32> to vector<8x32xf32>
    %166 = vector.shape_cast %165 : vector<8x32xf32> to vector<8x4x8xf32>
    %167 = tpu.transpose %166, [1, 0, 2] : vector<8x4x8xf32> -> vector<4x8x8xf32>
    %168 = vector.extract_strided_slice %161 {offsets = [0, 64], sizes = [8, 32], strides = [1, 1]} : vector<8x96xf32> to vector<8x32xf32>
    %169 = vector.shape_cast %168 : vector<8x32xf32> to vector<8x4x8xf32>
    %170 = tpu.transpose %169, [1, 0, 2] : vector<8x4x8xf32> -> vector<4x8x8xf32>
    %171 = arith.truncf %164 : vector<4x8x8xf32> to vector<4x8x8xbf16>
    %172 = arith.truncf %167 : vector<4x8x8xf32> to vector<4x8x8xbf16>
    "tpu.trace_start"() <{level = 10 : i32, message = "hqd,hkd->hqk"}> : () -> ()
    %cst_76 = arith.constant dense<0.000000e+00> : vector<4x8x8xf32>
    %173 = tpu.matmul %171, %172, %cst_76 {dimension_numbers = #tpu.dot_dimension_numbers<[2], [2], [1], [1], [0, 0, 0, 1, 1, 1], [0], [0]>} : vector<4x8x8xbf16>, vector<4x8x8xbf16>, vector<4x8x8xf32> -> vector<4x8x8xf32>
    "tpu.trace_stop"() : () -> ()
    %cst_77 = arith.constant dense<0xFF800000> : vector<4x8xf32>
    %174 = vector.multi_reduction <maximumf>, %173, %cst_77 [2] : vector<4x8x8xf32> to vector<4x8xf32>
    %175 = vector.shape_cast %174 : vector<4x8xf32> to vector<4x8x1xf32>
    %176 = vector.broadcast %175 : vector<4x8x1xf32> to vector<4x8x8xf32>
    %177 = arith.subf %173, %176 : vector<4x8x8xf32>
    %178 = math.exp %177 : vector<4x8x8xf32>
    %cst_78 = arith.constant dense<0.000000e+00> : vector<4x8xf32>
    %179 = vector.multi_reduction <add>, %178, %cst_78 [2] : vector<4x8x8xf32> to vector<4x8xf32>
    %180 = vector.shape_cast %179 : vector<4x8xf32> to vector<4x8x1xf32>
    %181 = tpu.reciprocal %180 {approx = true} : vector<4x8x1xf32> -> vector<4x8x1xf32>
    %182 = vector.broadcast %181 : vector<4x8x1xf32> to vector<4x8x8xf32>
    %183 = arith.mulf %178, %182 : vector<4x8x8xf32>
    %184 = arith.truncf %183 : vector<4x8x8xf32> to vector<4x8x8xbf16>
    %185 = arith.truncf %170 : vector<4x8x8xf32> to vector<4x8x8xbf16>
    "tpu.trace_start"() <{level = 10 : i32, message = "hqk,hkd->hqd"}> : () -> ()
    %cst_79 = arith.constant dense<0.000000e+00> : vector<4x8x8xf32>
    %186 = tpu.matmul %184, %185, %cst_79 {dimension_numbers = #tpu.dot_dimension_numbers<[2], [1], [1], [2], [0, 0, 0, 1, 1, 2], [0], [0]>} : vector<4x8x8xbf16>, vector<4x8x8xbf16>, vector<4x8x8xf32> -> vector<4x8x8xf32>
    "tpu.trace_stop"() : () -> ()
    %187 = tpu.transpose %186, [1, 0, 2] : vector<4x8x8xf32> -> vector<8x4x8xf32>
    %188 = vector.shape_cast %187 : vector<8x4x8xf32> to vector<8x32xf32>
    %189 = arith.truncf %188 : vector<8x32xf32> to vector<8x32xbf16>
    %c1_80 = arith.constant 1 : index
    %c0_81 = arith.constant 0 : index
    %c0_82 = arith.constant 0 : index
    %190 = vector.load %arg6[%c1_80, %c0_81, %c0_82] : memref<2x32x32xbf16, #tpu.memory_space<vmem>>, vector<1x32x32xbf16>
    %191 = vector.shape_cast %190 : vector<1x32x32xbf16> to vector<32x32xbf16>
    %cst_83 = arith.constant dense<0.000000e+00> : vector<8x32xf32>
    %192 = tpu.matmul %189, %191, %cst_83 {dimension_numbers = #tpu.dot_dimension_numbers<[1], [0], [0], [1], [0, 0, 1, 1], [], []>} : vector<8x32xbf16>, vector<32x32xbf16>, vector<8x32xf32> -> vector<8x32xf32>
    %c1_84 = arith.constant 1 : index
    %c0_85 = arith.constant 0 : index
    %c0_86 = arith.constant 0 : index
    %193 = vector.load %arg7[%c1_84, %c0_85, %c0_86] : memref<2x1x32xf32, #tpu.memory_space<vmem>>, vector<1x1x32xf32>
    %194 = vector.shape_cast %193 : vector<1x1x32xf32> to vector<1x32xf32>
    %195 = vector.broadcast %194 : vector<1x32xf32> to vector<8x32xf32>
    %196 = arith.addf %192, %195 : vector<8x32xf32>
    %197 = arith.addf %127, %196 : vector<8x32xf32>
    %c1_87 = arith.constant 1 : index
    %c0_88 = arith.constant 0 : index
    %c0_89 = arith.constant 0 : index
    %198 = vector.load %arg8[%c1_87, %c0_88, %c0_89] : memref<2x1x32xf32, #tpu.memory_space<vmem>>, vector<1x1x32xf32>
    %199 = vector.shape_cast %198 : vector<1x1x32xf32> to vector<1x32xf32>
    %c1_90 = arith.constant 1 : index
    %c0_91 = arith.constant 0 : index
    %c0_92 = arith.constant 0 : index
    %200 = vector.load %arg9[%c1_90, %c0_91, %c0_92] : memref<2x1x32xf32, #tpu.memory_space<vmem>>, vector<1x1x32xf32>
    %201 = vector.shape_cast %200 : vector<1x1x32xf32> to vector<1x32xf32>
    %cst_93 = arith.constant dense<0.000000e+00> : vector<8xf32>
    %202 = vector.multi_reduction <add>, %197, %cst_93 [1] : vector<8x32xf32> to vector<8xf32>
    %203 = vector.shape_cast %202 : vector<8xf32> to vector<8x1xf32>
    %cst_94 = arith.constant 3.200000e+01 : f32
    %204 = vector.broadcast %cst_94 : f32 to vector<8x1xf32>
    %205 = arith.divf %203, %204 : vector<8x1xf32>
    %206 = vector.broadcast %205 : vector<8x1xf32> to vector<8x32xf32>
    %207 = arith.subf %197, %206 : vector<8x32xf32>
    %208 = arith.mulf %207, %207 : vector<8x32xf32>
    %cst_95 = arith.constant dense<0.000000e+00> : vector<8xf32>
    %209 = vector.multi_reduction <add>, %208, %cst_95 [1] : vector<8x32xf32> to vector<8xf32>
    %210 = vector.shape_cast %209 : vector<8xf32> to vector<8x1xf32>
    %cst_96 = arith.constant 3.200000e+01 : f32
    %211 = vector.broadcast %cst_96 : f32 to vector<8x1xf32>
    %212 = arith.divf %210, %211 : vector<8x1xf32>
    %213 = vector.broadcast %205 : vector<8x1xf32> to vector<8x32xf32>
    %214 = arith.subf %197, %213 : vector<8x32xf32>
    %cst_97 = arith.constant 9.99999974E-6 : f32
    %215 = vector.broadcast %cst_97 : f32 to vector<8x1xf32>
    %216 = arith.addf %212, %215 : vector<8x1xf32>
    %217 = math.rsqrt %216 : vector<8x1xf32>
    %218 = vector.broadcast %217 : vector<8x1xf32> to vector<8x32xf32>
    %219 = arith.mulf %214, %218 : vector<8x32xf32>
    %220 = vector.broadcast %199 : vector<1x32xf32> to vector<8x32xf32>
    %221 = arith.mulf %219, %220 : vector<8x32xf32>
    %222 = vector.broadcast %201 : vector<1x32xf32> to vector<8x32xf32>
    %223 = arith.addf %221, %222 : vector<8x32xf32>
    %224 = arith.truncf %223 : vector<8x32xf32> to vector<8x32xbf16>
    %c1_98 = arith.constant 1 : index
    %c0_99 = arith.constant 0 : index
    %c0_100 = arith.constant 0 : index
    %225 = vector.load %arg10[%c1_98, %c0_99, %c0_100] : memref<2x32x128xbf16, #tpu.memory_space<vmem>>, vector<1x32x128xbf16>
    %226 = vector.shape_cast %225 : vector<1x32x128xbf16> to vector<32x128xbf16>
    %cst_101 = arith.constant dense<0.000000e+00> : vector<8x128xf32>
    %227 = tpu.matmul %224, %226, %cst_101 {dimension_numbers = #tpu.dot_dimension_numbers<[1], [0], [0], [1], [0, 0, 1, 1], [], []>} : vector<8x32xbf16>, vector<32x128xbf16>, vector<8x128xf32> -> vector<8x128xf32>
    %c1_102 = arith.constant 1 : index
    %c0_103 = arith.constant 0 : index
    %c0_104 = arith.constant 0 : index
    %228 = vector.load %arg11[%c1_102, %c0_103, %c0_104] : memref<2x1x128xf32, #tpu.memory_space<vmem>>, vector<1x1x128xf32>
    %229 = vector.shape_cast %228 : vector<1x1x128xf32> to vector<1x128xf32>
    %230 = vector.broadcast %229 : vector<1x128xf32> to vector<8x128xf32>
    %231 = arith.addf %227, %230 : vector<8x128xf32>
    %232 = arith.mulf %231, %231 : vector<8x128xf32>
    %233 = arith.mulf %231, %232 : vector<8x128xf32>
    %cst_105 = arith.constant 4.471500e-02 : f32
    %234 = vector.broadcast %cst_105 : f32 to vector<8x128xf32>
    %235 = arith.mulf %234, %233 : vector<8x128xf32>
    %236 = arith.addf %231, %235 : vector<8x128xf32>
    %cst_106 = arith.constant 0.797884583 : f32
    %237 = vector.broadcast %cst_106 : f32 to vector<8x128xf32>
    %238 = arith.mulf %237, %236 : vector<8x128xf32>
    %239 = math.tanh %238 : vector<8x128xf32>
    %cst_107 = arith.constant 1.000000e+00 : f32
    %240 = vector.broadcast %cst_107 : f32 to vector<8x128xf32>
    %241 = arith.addf %240, %239 : vector<8x128xf32>
    %cst_108 = arith.constant 5.000000e-01 : f32
    %242 = vector.broadcast %cst_108 : f32 to vector<8x128xf32>
    %243 = arith.mulf %242, %241 : vector<8x128xf32>
    %244 = arith.mulf %231, %243 : vector<8x128xf32>
    %245 = arith.truncf %244 : vector<8x128xf32> to vector<8x128xbf16>
    %c1_109 = arith.constant 1 : index
    %c0_110 = arith.constant 0 : index
    %c0_111 = arith.constant 0 : index
    %246 = vector.load %arg12[%c1_109, %c0_110, %c0_111] : memref<2x128x32xbf16, #tpu.memory_space<vmem>>, vector<1x128x32xbf16>
    %247 = vector.shape_cast %246 : vector<1x128x32xbf16> to vector<128x32xbf16>
    %cst_112 = arith.constant dense<0.000000e+00> : vector<8x32xf32>
    %248 = tpu.matmul %245, %247, %cst_112 {dimension_numbers = #tpu.dot_dimension_numbers<[1], [0], [0], [1], [0, 0, 1, 1], [], []>} : vector<8x128xbf16>, vector<128x32xbf16>, vector<8x32xf32> -> vector<8x32xf32>
    %c1_113 = arith.constant 1 : index
    %c0_114 = arith.constant 0 : index
    %c0_115 = arith.constant 0 : index
    %249 = vector.load %arg13[%c1_113, %c0_114, %c0_115] : memref<2x1x32xf32, #tpu.memory_space<vmem>>, vector<1x1x32xf32>
    %250 = vector.shape_cast %249 : vector<1x1x32xf32> to vector<1x32xf32>
    %251 = vector.broadcast %250 : vector<1x32xf32> to vector<8x32xf32>
    %252 = arith.addf %248, %251 : vector<8x32xf32>
    %253 = arith.addf %197, %252 : vector<8x32xf32>
    %c0_116 = arith.constant 0 : index
    %c0_117 = arith.constant 0 : index
    %254 = vector.load %arg14[%c0_116, %c0_117] : memref<1x32xf32, #tpu.memory_space<vmem>>, vector<1x32xf32>
    %c0_118 = arith.constant 0 : index
    %c0_119 = arith.constant 0 : index
    %255 = vector.load %arg15[%c0_118, %c0_119] : memref<1x32xf32, #tpu.memory_space<vmem>>, vector<1x32xf32>
    %cst_120 = arith.constant dense<0.000000e+00> : vector<8xf32>
    %256 = vector.multi_reduction <add>, %253, %cst_120 [1] : vector<8x32xf32> to vector<8xf32>
    %257 = vector.shape_cast %256 : vector<8xf32> to vector<8x1xf32>
    %cst_121 = arith.constant 3.200000e+01 : f32
    %258 = vector.broadcast %cst_121 : f32 to vector<8x1xf32>
    %259 = arith.divf %257, %258 : vector<8x1xf32>
    %260 = vector.broadcast %259 : vector<8x1xf32> to vector<8x32xf32>
    %261 = arith.subf %253, %260 : vector<8x32xf32>
    %262 = arith.mulf %261, %261 : vector<8x32xf32>
    %cst_122 = arith.constant dense<0.000000e+00> : vector<8xf32>
    %263 = vector.multi_reduction <add>, %262, %cst_122 [1] : vector<8x32xf32> to vector<8xf32>
    %264 = vector.shape_cast %263 : vector<8xf32> to vector<8x1xf32>
    %cst_123 = arith.constant 3.200000e+01 : f32
    %265 = vector.broadcast %cst_123 : f32 to vector<8x1xf32>
    %266 = arith.divf %264, %265 : vector<8x1xf32>
    %267 = vector.broadcast %259 : vector<8x1xf32> to vector<8x32xf32>
    %268 = arith.subf %253, %267 : vector<8x32xf32>
    %cst_124 = arith.constant 9.99999974E-6 : f32
    %269 = vector.broadcast %cst_124 : f32 to vector<8x1xf32>
    %270 = arith.addf %266, %269 : vector<8x1xf32>
    %271 = math.rsqrt %270 : vector<8x1xf32>
    %272 = vector.broadcast %271 : vector<8x1xf32> to vector<8x32xf32>
    %273 = arith.mulf %268, %272 : vector<8x32xf32>
    %274 = vector.broadcast %254 : vector<1x32xf32> to vector<8x32xf32>
    %275 = arith.mulf %273, %274 : vector<8x32xf32>
    %276 = vector.broadcast %255 : vector<1x32xf32> to vector<8x32xf32>
    %277 = arith.addf %275, %276 : vector<8x32xf32>
    %c0_125 = arith.constant 0 : index
    %c0_126 = arith.constant 0 : index
    %c0_127 = arith.constant 0 : index
    %278 = vector.load %arg16[%c0_125, %c0_126, %c0_127] : memref<1x8x32xf32, #tpu.memory_space<vmem>>, vector<1x8x32xf32>
    %279 = vector.shape_cast %278 : vector<1x8x32xf32> to vector<8x32xf32>
    %280 = vector.shape_cast %277 : vector<8x32xf32> to vector<1x8x32xf32>
    tpu.vector_store %arg16[%c0_125, %c0_126, %c0_127], %280 {strides = array<i32>} : memref<1x8x32xf32, #tpu.memory_space<vmem>>, vector<1x8x32xf32>,
    return
  }
  func.func @transform_0(%arg0: i32) -> (i32, i32, i32) {
    %c0_i32 = arith.constant 0 : i32
    %c0_i32_0 = arith.constant 0 : i32
    %c0_i32_1 = arith.constant 0 : i32
    return %arg0, %c0_i32, %c0_i32_0 : i32, i32, i32
  }
  func.func @transform_1(%arg0: i32) -> (i32, i32, i32) {
    %c0_i32 = arith.constant 0 : i32
    %c0_i32_0 = arith.constant 0 : i32
    %c0_i32_1 = arith.constant 0 : i32
    %c0_i32_2 = arith.constant 0 : i32
    return %c0_i32, %c0_i32_0, %c0_i32_1 : i32, i32, i32
  }
  func.func @transform_2(%arg0: i32) -> (i32, i32, i32) {
    %c0_i32 = arith.constant 0 : i32
    %c0_i32_0 = arith.constant 0 : i32
    %c0_i32_1 = arith.constant 0 : i32
    %c0_i32_2 = arith.constant 0 : i32
    return %c0_i32, %c0_i32_0, %c0_i32_1 : i32, i32, i32
  }
  func.func @transform_3(%arg0: i32) -> (i32, i32, i32) {
    %c0_i32 = arith.constant 0 : i32
    %c0_i32_0 = arith.constant 0 : i32
    %c0_i32_1 = arith.constant 0 : i32
    %c0_i32_2 = arith.constant 0 : i32
    return %c0_i32, %c0_i32_0, %c0_i32_1 : i32, i32, i32
  }
  func.func @transform_4(%arg0: i32) -> (i32, i32, i32) {
    %c0_i32 = arith.constant 0 : i32
    %c0_i32_0 = arith.constant 0 : i32
    %c0_i32_1 = arith.constant 0 : i32
    %c0_i32_2 = arith.constant 0 : i32
    return %c0_i32, %c0_i32_0, %c0_i32_1 : i32, i32, i32
  }
  func.func @transform_5(%arg0: i32) -> (i32, i32, i32) {
    %c0_i32 = arith.constant 0 : i32
    %c0_i32_0 = arith.constant 0 : i32
    %c0_i32_1 = arith.constant 0 : i32
    %c0_i32_2 = arith.constant 0 : i32
    return %c0_i32, %c0_i32_0, %c0_i32_1 : i32, i32, i32
  }
  func.func @transform_6(%arg0: i32) -> (i32, i32, i32) {
    %c0_i32 = arith.constant 0 : i32
    %c0_i32_0 = arith.constant 0 : i32
    %c0_i32_1 = arith.constant 0 : i32
    %c0_i32_2 = arith.constant 0 : i32
    return %c0_i32, %c0_i32_0, %c0_i32_1 : i32, i32, i32
  }
  func.func @transform_7(%arg0: i32) -> (i32, i32, i32) {
    %c0_i32 = arith.constant 0 : i32
    %c0_i32_0 = arith.constant 0 : i32
    %c0_i32_1 = arith.constant 0 : i32
    %c0_i32_2 = arith.constant 0 : i32
    return %c0_i32, %c0_i32_0, %c0_i32_1 : i32, i32, i32
  }
  func.func @transform_8(%arg0: i32) -> (i32, i32, i32) {
    %c0_i32 = arith.constant 0 : i32
    %c0_i32_0 = arith.constant 0 : i32
    %c0_i32_1 = arith.constant 0 : i32
    %c0_i32_2 = arith.constant 0 : i32
    return %c0_i32, %c0_i32_0, %c0_i32_1 : i32, i32, i32
  }
  func.func @transform_9(%arg0: i32) -> (i32, i32, i32) {
    %c0_i32 = arith.constant 0 : i32
    %c0_i32_0 = arith.constant 0 : i32
    %c0_i32_1 = arith.constant 0 : i32
    %c0_i32_2 = arith.constant 0 : i32
    return %c0_i32, %c0_i32_0, %c0_i32_1 : i32, i32, i32
  }
  func.func @transform_10(%arg0: i32) -> (i32, i32, i32) {
    %c0_i32 = arith.constant 0 : i32
    %c0_i32_0 = arith.constant 0 : i32
    %c0_i32_1 = arith.constant 0 : i32
    %c0_i32_2 = arith.constant 0 : i32
    return %c0_i32, %c0_i32_0, %c0_i32_1 : i32, i32, i32
  }
  func.func @transform_11(%arg0: i32) -> (i32, i32, i32) {
    %c0_i32 = arith.constant 0 : i32
    %c0_i32_0 = arith.constant 0 : i32
    %c0_i32_1 = arith.constant 0 : i32
    %c0_i32_2 = arith.constant 0 : i32
    return %c0_i32, %c0_i32_0, %c0_i32_1 : i32, i32, i32
  }
  func.func @transform_12(%arg0: i32) -> (i32, i32, i32) {
    %c0_i32 = arith.constant 0 : i32
    %c0_i32_0 = arith.constant 0 : i32
    %c0_i32_1 = arith.constant 0 : i32
    %c0_i32_2 = arith.constant 0 : i32
    return %c0_i32, %c0_i32_0, %c0_i32_1 : i32, i32, i32
  }
  func.func @transform_13(%arg0: i32) -> (i32, i32) {
    %c0_i32 = arith.constant 0 : i32
    %c0_i32_0 = arith.constant 0 : i32
    %c0_i32_1 = arith.constant 0 : i32
    return %c0_i32, %c0_i32_0 : i32, i32
  }
  func.func @transform_14(%arg0: i32) -> (i32, i32) {
    %c0_i32 = arith.constant 0 : i32
    %c0_i32_0 = arith.constant 0 : i32
    %c0_i32_1 = arith.constant 0 : i32
    return %c0_i32, %c0_i32_0 : i32, i32
  }
  func.func @transform_15(%arg0: i32) -> (i32, i32, i32) {
    %c0_i32 = arith.constant 0 : i32
    %c0_i32_0 = arith.constant 0 : i32
    %c0_i32_1 = arith.constant 0 : i32
    return %arg0, %c0_i32, %c0_i32_0 : i32, i32, i32
  }
}

</mosaic_0001>

<llo_original>
// kernel: esm_forward.1
$region0: #{esm_forward.1}
  #allocation0 [shape = 'u32[]', space=smem, size = 0x4, offset = 0x4, fixed_abs, tag = 'smem constant byte address 0x4 - core index']
  #allocation1 [shape = 'u32[72,128]{1,0:T(1,128)}', space=vmem, size = 0x9000, scoped, tag = 'internal scratch']
  %s0 = inlined_call_operand.vmem [shape: f32[2,8,32], index: 0, kind: input, shape index: {}]
  %s1 = inlined_call_operand.vmem [shape: f32[2,1,32], index: 1, kind: input, shape index: {}]
  %s2 = inlined_call_operand.vmem [shape: f32[2,1,32], index: 2, kind: input, shape index: {}]
  %s3 = inlined_call_operand.vmem [shape: bf16[2,32,96], index: 3, kind: input, shape index: {}]
  %s4 = inlined_call_operand.vmem [shape: f32[2,1,96], index: 4, kind: input, shape index: {}]
  %s5 = inlined_call_operand.vmem [shape: bf16[2,32,32], index: 5, kind: input, shape index: {}]
  %s6 = inlined_call_operand.vmem [shape: f32[2,1,32], index: 6, kind: input, shape index: {}]
  %s7 = inlined_call_operand.vmem [shape: f32[2,1,32], index: 7, kind: input, shape index: {}]
  %s8 = inlined_call_operand.vmem [shape: f32[2,1,32], index: 8, kind: input, shape index: {}]
  %s9 = inlined_call_operand.vmem [shape: bf16[2,32,128], index: 9, kind: input, shape index: {}]
  %s10 = inlined_call_operand.vmem [shape: f32[2,1,128], index: 10, kind: input, shape index: {}]
  %s11 = inlined_call_operand.vmem [shape: bf16[2,128,32], index: 11, kind: input, shape index: {}]
  %s12 = inlined_call_operand.vmem [shape: f32[2,1,32], index: 12, kind: input, shape index: {}]
  %s13 = inlined_call_operand.vmem [shape: f32[1,32], index: 13, kind: input, shape index: {}]
  %s14 = inlined_call_operand.vmem [shape: f32[1,32], index: 14, kind: input, shape index: {}]
  %s15 = inlined_call_operand.hbm [shape: f32[2,8,32], index: 15, kind: output, shape index: {}]
  %s16 = sld [smem:[#allocation0]]
  $region93: #{esm_forward.1} parent=0
    _
  %s18 = ssub.s32 1, %s16
  %s19 = scalar_select 0, %s18, %s16
  $region1: #{esm_forward.1} parent=0
    #allocation2 [shape = 'u8[8192]{0}', space=vmem, size = 0x2000, scoped, tag = 'output window, operand 0']
    #allocation3 [shape = 's32[2]{0}', space=sflag, size = 0x8, scoped, tag = 'scoped memory for esm_forward.1']
    %20 = vsyncpa [#allocation3], 0
    %s21 = scalar_lea.sflag [#allocation3], 1
    %22 = vsyncpa %s21, 0
    loop: start=0, step=1, limit=4
    $region2: #{esm_forward.1} parent=1 // loop_pre_header
      _
    $region3: #{esm_forward.1} parent=1 // loop_header
      %s24 = sphi 0, %s28
      %p25 = scmp.ge.s32.totalorder %s24, 4
      %s34 = sphi 0, %s36
      %s37 = sphi 0, %s34
      %s38 = sphi 0, %s37
      %s54 = sphi 0, %s38
      %s58 = sphi 0, %s58
      %s60 = sphi 0, %s58
      %s61 = sphi 0, %s60
      %s75 = sphi 0, %s61
      %s79 = sphi 0, %s79
      %s81 = sphi 0, %s79
      %s82 = sphi 0, %s81
      %s96 = sphi 0, %s82
      %s100 = sphi 0, %s100
      %s102 = sphi 0, %s100
      %s103 = sphi 0, %s102
      %s117 = sphi 0, %s103
      %s121 = sphi 0, %s121
      %s123 = sphi 0, %s121
      %s124 = sphi 0, %s123
      %s138 = sphi 0, %s124
      %s142 = sphi 0, %s142
      %s144 = sphi 0, %s142
      %s145 = sphi 0, %s144
      %s159 = sphi 0, %s145
      %s163 = sphi 0, %s163
      %s165 = sphi 0, %s163
      %s166 = sphi 0, %s165
      %s180 = sphi 0, %s166
      %s184 = sphi 0, %s184
      %s186 = sphi 0, %s184
      %s187 = sphi 0, %s186
      %s201 = sphi 0, %s187
      %s205 = sphi 0, %s205
      %s207 = sphi 0, %s205
      %s208 = sphi 0, %s207
      %s222 = sphi 0, %s208
      %s226 = sphi 0, %s226
      %s228 = sphi 0, %s226
      %s229 = sphi 0, %s228
      %s243 = sphi 0, %s229
      %s247 = sphi 0, %s247
      %s249 = sphi 0, %s247
      %s250 = sphi 0, %s249
      %s264 = sphi 0, %s250
      %s268 = sphi 0, %s268
      %s270 = sphi 0, %s268
      %s271 = sphi 0, %s270
      %s285 = sphi 0, %s271
      %s289 = sphi 0, %s289
      %s291 = sphi 0, %s289
      %s292 = sphi 0, %s291
      %s306 = sphi 0, %s292
      %s310 = sphi 0, %s310
      %s312 = sphi 0, %s310
      %s313 = sphi 0, %s312
      %s327 = sphi 0, %s313
      %s331 = sphi 0, %s331
      %s333 = sphi 0, %s331
      %s334 = sphi 0, %s333
      %s348 = sphi 0, %s334
      %s354 = sphi 0, %s356
      %s357 = sphi 0, %s354
      %s358 = sphi 0, %s357
      %s374 = sphi 0, %s358
    $region4: #{esm_forward.1} parent=1 // loop_header_branch
      %27 = sbr.rel (%p25) target = $region8
    $region5: #{esm_forward.1} parent=1 // loop_body
      %s29 = ssub.s32 %s24, 1
      %s30 = ssub.s32 %s24, 2
      %s31 = sadd.s32 %s24, 1
      %s32 = ssub.s32 %s24, %s31
      %p33 = scmp.eq.s32.totalorder %s32, 0
      %s35 = sadd.s32 %s34, 1
      %s36 = scalar_select %p33, %s34, %s35
      %p39 = pneg %p33
      %p40 = scmp.eq.s32.totalorder %s24, 1
      %p41 = por %p39, %p40
      %p42 = scmp.ne.s32.totalorder %s34, %s37
      %p43 = scmp.eq.s32.totalorder %s24, 0
      %p44 = por %p42, %p43
      %p45 = scmp.ne.s32.totalorder %s34, %s37
      %p46 = scmp.eq.s32.totalorder %s29, 1
      %p47 = por %p45, %p46
      %p48 = scmp.ne.s32.totalorder %s37, %s38
      %p49 = scmp.eq.s32.totalorder %s29, 0
      %p50 = por %p48, %p49
      %p51 = scmp.ne.s32.totalorder %s37, %s38
      %p52 = scmp.eq.s32.totalorder %s30, 1
      %p53 = por %p51, %p52
      %p55 = scmp.ne.s32.totalorder %s38, %s54
      %p56 = scmp.eq.s32.totalorder %s30, 0
      %p57 = por %p55, %p56
      %s59 = sadd.s32 %s58, 1
      %p62 = scmp.eq.s32.totalorder %s24, 1
      %p63 = scmp.ne.s32.totalorder %s58, %s60
      %p64 = scmp.eq.s32.totalorder %s24, 0
      %p65 = por %p63, %p64
      %p66 = scmp.ne.s32.totalorder %s58, %s60
      %p67 = scmp.eq.s32.totalorder %s29, 1
      %p68 = por %p66, %p67
      %p69 = scmp.ne.s32.totalorder %s60, %s61
      %p70 = scmp.eq.s32.totalorder %s29, 0
      %p71 = por %p69, %p70
      %p72 = scmp.ne.s32.totalorder %s60, %s61
      %p73 = scmp.eq.s32.totalorder %s30, 1
      %p74 = por %p72, %p73
      %p76 = scmp.ne.s32.totalorder %s61, %s75
      %p77 = scmp.eq.s32.totalorder %s30, 0
      %p78 = por %p76, %p77
      %s80 = sadd.s32 %s79, 1
      %p83 = scmp.eq.s32.totalorder %s24, 1
      %p84 = scmp.ne.s32.totalorder %s79, %s81
      %p85 = scmp.eq.s32.totalorder %s24, 0
      %p86 = por %p84, %p85
      %p87 = scmp.ne.s32.totalorder %s79, %s81
      %p88 = scmp.eq.s32.totalorder %s29, 1
      %p89 = por %p87, %p88
      %p90 = scmp.ne.s32.totalorder %s81, %s82
      %p91 = scmp.eq.s32.totalorder %s29, 0
      %p92 = por %p90, %p91
      %p93 = scmp.ne.s32.totalorder %s81, %s82
      %p94 = scmp.eq.s32.totalorder %s30, 1
      %p95 = por %p93, %p94
      %p97 = scmp.ne.s32.totalorder %s82, %s96
      %p98 = scmp.eq.s32.totalorder %s30, 0
      %p99 = por %p97, %p98
      %s101 = sadd.s32 %s100, 1
      %p104 = scmp.eq.s32.totalorder %s24, 1
      %p105 = scmp.ne.s32.totalorder %s100, %s102
      %p106 = scmp.eq.s32.totalorder %s24, 0
      %p107 = por %p105, %p106
      %p108 = scmp.ne.s32.totalorder %s100, %s102
      %p109 = scmp.eq.s32.totalorder %s29, 1
      %p110 = por %p108, %p109
      %p111 = scmp.ne.s32.totalorder %s102, %s103
      %p112 = scmp.eq.s32.totalorder %s29, 0
      %p113 = por %p111, %p112
      %p114 = scmp.ne.s32.totalorder %s102, %s103
      %p115 = scmp.eq.s32.totalorder %s30, 1
      %p116 = por %p114, %p115
      %p118 = scmp.ne.s32.totalorder %s103, %s117
      %p119 = scmp.eq.s32.totalorder %s30, 0
      %p120 = por %p118, %p119
      %s122 = sadd.s32 %s121, 1
      %p125 = scmp.eq.s32.totalorder %s24, 1
      %p126 = scmp.ne.s32.totalorder %s121, %s123
      %p127 = scmp.eq.s32.totalorder %s24, 0
      %p128 = por %p126, %p127
      %p129 = scmp.ne.s32.totalorder %s121, %s123
      %p130 = scmp.eq.s32.totalorder %s29, 1
      %p131 = por %p129, %p130
      %p132 = scmp.ne.s32.totalorder %s123, %s124
      %p133 = scmp.eq.s32.totalorder %s29, 0
      %p134 = por %p132, %p133
      %p135 = scmp.ne.s32.totalorder %s123, %s124
      %p136 = scmp.eq.s32.totalorder %s30, 1
      %p137 = por %p135, %p136
      %p139 = scmp.ne.s32.totalorder %s124, %s138
      %p140 = scmp.eq.s32.totalorder %s30, 0
      %p141 = por %p139, %p140
      %s143 = sadd.s32 %s142, 1
      %p146 = scmp.eq.s32.totalorder %s24, 1
      %p147 = scmp.ne.s32.totalorder %s142, %s144
      %p148 = scmp.eq.s32.totalorder %s24, 0
      %p149 = por %p147, %p148
      %p150 = scmp.ne.s32.totalorder %s142, %s144
      %p151 = scmp.eq.s32.totalorder %s29, 1
      %p152 = por %p150, %p151
      %p153 = scmp.ne.s32.totalorder %s144, %s145
      %p154 = scmp.eq.s32.totalorder %s29, 0
      %p155 = por %p153, %p154
      %p156 = scmp.ne.s32.totalorder %s144, %s145
      %p157 = scmp.eq.s32.totalorder %s30, 1
      %p158 = por %p156, %p157
      %p160 = scmp.ne.s32.totalorder %s145, %s159
      %p161 = scmp.eq.s32.totalorder %s30, 0
      %p162 = por %p160, %p161
      %s164 = sadd.s32 %s163, 1
      %p167 = scmp.eq.s32.totalorder %s24, 1
      %p168 = scmp.ne.s32.totalorder %s163, %s165
      %p169 = scmp.eq.s32.totalorder %s24, 0
      %p170 = por %p168, %p169
      %p171 = scmp.ne.s32.totalorder %s163, %s165
      %p172 = scmp.eq.s32.totalorder %s29, 1
      %p173 = por %p171, %p172
      %p174 = scmp.ne.s32.totalorder %s165, %s166
      %p175 = scmp.eq.s32.totalorder %s29, 0
      %p176 = por %p174, %p175
      %p177 = scmp.ne.s32.totalorder %s165, %s166
      %p178 = scmp.eq.s32.totalorder %s30, 1
      %p179 = por %p177, %p178
      %p181 = scmp.ne.s32.totalorder %s166, %s180
      %p182 = scmp.eq.s32.totalorder %s30, 0
      %p183 = por %p181, %p182
      %s185 = sadd.s32 %s184, 1
      %p188 = scmp.eq.s32.totalorder %s24, 1
      %p189 = scmp.ne.s32.totalorder %s184, %s186
      %p190 = scmp.eq.s32.totalorder %s24, 0
      %p191 = por %p189, %p190
      %p192 = scmp.ne.s32.totalorder %s184, %s186
      %p193 = scmp.eq.s32.totalorder %s29, 1
      %p194 = por %p192, %p193
      %p195 = scmp.ne.s32.totalorder %s186, %s187
      %p196 = scmp.eq.s32.totalorder %s29, 0
      %p197 = por %p195, %p196
      %p198 = scmp.ne.s32.totalorder %s186, %s187
      %p199 = scmp.eq.s32.totalorder %s30, 1
      %p200 = por %p198, %p199
      %p202 = scmp.ne.s32.totalorder %s187, %s201
      %p203 = scmp.eq.s32.totalorder %s30, 0
      %p204 = por %p202, %p203
      %s206 = sadd.s32 %s205, 1
      %p209 = scmp.eq.s32.totalorder %s24, 1
      %p210 = scmp.ne.s32.totalorder %s205, %s207
      %p211 = scmp.eq.s32.totalorder %s24, 0
      %p212 = por %p210, %p211
      %p213 = scmp.ne.s32.totalorder %s205, %s207
      %p214 = scmp.eq.s32.totalorder %s29, 1
      %p215 = por %p213, %p214
      %p216 = scmp.ne.s32.totalorder %s207, %s208
      %p217 = scmp.eq.s32.totalorder %s29, 0
      %p218 = por %p216, %p217
      %p219 = scmp.ne.s32.totalorder %s207, %s208
      %p220 = scmp.eq.s32.totalorder %s30, 1
      %p221 = por %p219, %p220
      %p223 = scmp.ne.s32.totalorder %s208, %s222
      %p224 = scmp.eq.s32.totalorder %s30, 0
      %p225 = por %p223, %p224
      %s227 = sadd.s32 %s226, 1
      %p230 = scmp.eq.s32.totalorder %s24, 1
      %p231 = scmp.ne.s32.totalorder %s226, %s228
      %p232 = scmp.eq.s32.totalorder %s24, 0
      %p233 = por %p231, %p232
      %p234 = scmp.ne.s32.totalorder %s226, %s228
      %p235 = scmp.eq.s32.totalorder %s29, 1
      %p236 = por %p234, %p235
      %p237 = scmp.ne.s32.totalorder %s228, %s229
      %p238 = scmp.eq.s32.totalorder %s29, 0
      %p239 = por %p237, %p238
      %p240 = scmp.ne.s32.totalorder %s228, %s229
      %p241 = scmp.eq.s32.totalorder %s30, 1
      %p242 = por %p240, %p241
      %p244 = scmp.ne.s32.totalorder %s229, %s243
      %p245 = scmp.eq.s32.totalorder %s30, 0
      %p246 = por %p244, %p245
      %s248 = sadd.s32 %s247, 1
      %p251 = scmp.eq.s32.totalorder %s24, 1
      %p252 = scmp.ne.s32.totalorder %s247, %s249
      %p253 = scmp.eq.s32.totalorder %s24, 0
      %p254 = por %p252, %p253
      %p255 = scmp.ne.s32.totalorder %s247, %s249
      %p256 = scmp.eq.s32.totalorder %s29, 1
      %p257 = por %p255, %p256
      %p258 = scmp.ne.s32.totalorder %s249, %s250
      %p259 = scmp.eq.s32.totalorder %s29, 0
      %p260 = por %p258, %p259
      %p261 = scmp.ne.s32.totalorder %s249, %s250
      %p262 = scmp.eq.s32.totalorder %s30, 1
      %p263 = por %p261, %p262
      %p265 = scmp.ne.s32.totalorder %s250, %s264
      %p266 = scmp.eq.s32.totalorder %s30, 0
      %p267 = por %p265, %p266
      %s269 = sadd.s32 %s268, 1
      %p272 = scmp.eq.s32.totalorder %s24, 1
      %p273 = scmp.ne.s32.totalorder %s268, %s270
      %p274 = scmp.eq.s32.totalorder %s24, 0
      %p275 = por %p273, %p274
      %p276 = scmp.ne.s32.totalorder %s268, %s270
      %p277 = scmp.eq.s32.totalorder %s29, 1
      %p278 = por %p276, %p277
      %p279 = scmp.ne.s32.totalorder %s270, %s271
      %p280 = scmp.eq.s32.totalorder %s29, 0
      %p281 = por %p279, %p280
      %p282 = scmp.ne.s32.totalorder %s270, %s271
      %p283 = scmp.eq.s32.totalorder %s30, 1
      %p284 = por %p282, %p283
      %p286 = scmp.ne.s32.totalorder %s271, %s285
      %p287 = scmp.eq.s32.totalorder %s30, 0
      %p288 = por %p286, %p287
      %s290 = sadd.s32 %s289, 1
      %p293 = scmp.eq.s32.totalorder %s24, 1
      %p294 = scmp.ne.s32.totalorder %s289, %s291
      %p295 = scmp.eq.s32.totalorder %s24, 0
      %p296 = por %p294, %p295
      %p297 = scmp.ne.s32.totalorder %s289, %s291
      %p298 = scmp.eq.s32.totalorder %s29, 1
      %p299 = por %p297, %p298
      %p300 = scmp.ne.s32.totalorder %s291, %s292
      %p301 = scmp.eq.s32.totalorder %s29, 0
      %p302 = por %p300, %p301
      %p303 = scmp.ne.s32.totalorder %s291, %s292
      %p304 = scmp.eq.s32.totalorder %s30, 1
      %p305 = por %p303, %p304
      %p307 = scmp.ne.s32.totalorder %s292, %s306
      %p308 = scmp.eq.s32.totalorder %s30, 0
      %p309 = por %p307, %p308
      %s311 = sadd.s32 %s310, 1
      %p314 = scmp.eq.s32.totalorder %s24, 1
      %p315 = scmp.ne.s32.totalorder %s310, %s312
      %p316 = scmp.eq.s32.totalorder %s24, 0
      %p317 = por %p315, %p316
      %p318 = scmp.ne.s32.totalorder %s310, %s312
      %p319 = scmp.eq.s32.totalorder %s29, 1
      %p320 = por %p318, %p319
      %p321 = scmp.ne.s32.totalorder %s312, %s313
      %p322 = scmp.eq.s32.totalorder %s29, 0
      %p323 = por %p321, %p322
      %p324 = scmp.ne.s32.totalorder %s312, %s313
      %p325 = scmp.eq.s32.totalorder %s30, 1
      %p326 = por %p324, %p325
      %p328 = scmp.ne.s32.totalorder %s313, %s327
      %p329 = scmp.eq.s32.totalorder %s30, 0
      %p330 = por %p328, %p329
      %s332 = sadd.s32 %s331, 1
      %p335 = scmp.eq.s32.totalorder %s24, 1
      %p336 = scmp.ne.s32.totalorder %s331, %s333
      %p337 = scmp.eq.s32.totalorder %s24, 0
      %p338 = por %p336, %p337
      %p339 = scmp.ne.s32.totalorder %s331, %s333
      %p340 = scmp.eq.s32.totalorder %s29, 1
      %p341 = por %p339, %p340
      %p342 = scmp.ne.s32.totalorder %s333, %s334
      %p343 = scmp.eq.s32.totalorder %s29, 0
      %p344 = por %p342, %p343
      %p345 = scmp.ne.s32.totalorder %s333, %s334
      %p346 = scmp.eq.s32.totalorder %s30, 1
      %p347 = por %p345, %p346
      %p349 = scmp.ne.s32.totalorder %s334, %s348
      %p350 = scmp.eq.s32.totalorder %s30, 0
      %p351 = por %p349, %p350
      %s352 = ssub.s32 %s24, %s31
      %p353 = scmp.eq.s32.totalorder %s352, 0
      %s355 = sadd.s32 %s354, 1
      %s356 = scalar_select %p353, %s354, %s355
      %p359 = pneg %p353
      %p360 = scmp.eq.s32.totalorder %s24, 1
      %p361 = por %p359, %p360
      %p362 = scmp.ne.s32.totalorder %s354, %s357
      %p363 = scmp.eq.s32.totalorder %s24, 0
      %p364 = por %p362, %p363
      %p365 = scmp.ne.s32.totalorder %s354, %s357
      %p366 = scmp.eq.s32.totalorder %s29, 1
      %p367 = por %p365, %p366
      %p368 = scmp.ne.s32.totalorder %s357, %s358
      %p369 = scmp.eq.s32.totalorder %s29, 0
      %p370 = por %p368, %p369
      %p371 = scmp.ne.s32.totalorder %s357, %s358
      %p372 = scmp.eq.s32.totalorder %s30, 1
      %p373 = por %p371, %p372
      %p375 = scmp.ne.s32.totalorder %s358, %s374
      %p376 = scmp.eq.s32.totalorder %s30, 0
      %p377 = por %p375, %p376
      %p378 = scmp.le.s32.totalorder 1, %s24
      %p379 = scmp.lt.s32.totalorder %s24, 3
      %p380 = pnand %p378, %p379
      %p381 = pneg %p380
      // Predicated region
      $region9: #{esm_forward.1} parent=5 // pred_check
        _
      $region10: #{esm_forward.1} parent=5 // pred_check_branch
        %383 = sbr.rel (%p380) target = $region12
      $region11: #{esm_forward.1} parent=5 // pred_region
        %s384 = ssub.s32 %s24, 1
        // Predicated region
        $region13: #{esm_forward.1} parent=11 // pred_check
          %p385 = pneg %p71
        $region14: #{esm_forward.1} parent=11 // pred_check_branch
          %387 = sbr.rel (%p385) target = $region16
        $region15: #{esm_forward.1} parent=11 // pred_region
          _
        $region16: #{esm_forward.1} parent=11 // pred_fallthru
          _
        // Predicated region
        $region17: #{esm_forward.1} parent=11 // pred_check
          %p388 = pneg %p92
        $region18: #{esm_forward.1} parent=11 // pred_check_branch
          %390 = sbr.rel (%p388) target = $region20
        $region19: #{esm_forward.1} parent=11 // pred_region
          _
        $region20: #{esm_forward.1} parent=11 // pred_fallthru
          _
        // Predicated region
        $region21: #{esm_forward.1} parent=11 // pred_check
          %p391 = pneg %p113
        $region22: #{esm_forward.1} parent=11 // pred_check_branch
          %393 = sbr.rel (%p391) target = $region24
        $region23: #{esm_forward.1} parent=11 // pred_region
          _
        $region24: #{esm_forward.1} parent=11 // pred_fallthru
          _
        // Predicated region
        $region25: #{esm_forward.1} parent=11 // pred_check
          %p394 = pneg %p134
        $region26: #{esm_forward.1} parent=11 // pred_check_branch
          %396 = sbr.rel (%p394) target = $region28
        $region27: #{esm_forward.1} parent=11 // pred_region
          _
        $region28: #{esm_forward.1} parent=11 // pred_fallthru
          _
        // Predicated region
        $region29: #{esm_forward.1} parent=11 // pred_check
          %p397 = pneg %p155
        $region30: #{esm_forward.1} parent=11 // pred_check_branch
          %399 = sbr.rel (%p397) target = $region32
        $region31: #{esm_forward.1} parent=11 // pred_region
          _
        $region32: #{esm_forward.1} parent=11 // pred_fallthru
          _
        // Predicated region
        $region33: #{esm_forward.1} parent=11 // pred_check
          %p400 = pneg %p176
        $region34: #{esm_forward.1} parent=11 // pred_check_branch
          %402 = sbr.rel (%p400) target = $region36
        $region35: #{esm_forward.1} parent=11 // pred_region
          _
        $region36: #{esm_forward.1} parent=11 // pred_fallthru
          _
        // Predicated region
        $region37: #{esm_forward.1} parent=11 // pred_check
          %p403 = pneg %p197
        $region38: #{esm_forward.1} parent=11 // pred_check_branch
          %405 = sbr.rel (%p403) target = $region40
        $region39: #{esm_forward.1} parent=11 // pred_region
          _
        $region40: #{esm_forward.1} parent=11 // pred_fallthru
          _
        // Predicated region
        $region41: #{esm_forward.1} parent=11 // pred_check
          %p406 = pneg %p218
        $region42: #{esm_forward.1} parent=11 // pred_check_branch
          %408 = sbr.rel (%p406) target = $region44
        $region43: #{esm_forward.1} parent=11 // pred_region
          _
        $region44: #{esm_forward.1} parent=11 // pred_fallthru
          _
        // Predicated region
        $region45: #{esm_forward.1} parent=11 // pred_check
          %p409 = pneg %p239
        $region46: #{esm_forward.1} parent=11 // pred_check_branch
          %411 = sbr.rel (%p409) target = $region48
        $region47: #{esm_forward.1} parent=11 // pred_region
          _
        $region48: #{esm_forward.1} parent=11 // pred_fallthru
          _
        // Predicated region
        $region49: #{esm_forward.1} parent=11 // pred_check
          %p412 = pneg %p260
        $region50: #{esm_forward.1} parent=11 // pred_check_branch
          %414 = sbr.rel (%p412) target = $region52
        $region51: #{esm_forward.1} parent=11 // pred_region
          _
        $region52: #{esm_forward.1} parent=11 // pred_fallthru
          _
        // Predicated region
        $region53: #{esm_forward.1} parent=11 // pred_check
          %p415 = pneg %p281
        $region54: #{esm_forward.1} parent=11 // pred_check_branch
          %417 = sbr.rel (%p415) target = $region56
        $region55: #{esm_forward.1} parent=11 // pred_region
          _
        $region56: #{esm_forward.1} parent=11 // pred_fallthru
          _
        // Predicated region
        $region57: #{esm_forward.1} parent=11 // pred_check
          %p418 = pneg %p302
        $region58: #{esm_forward.1} parent=11 // pred_check_branch
          %420 = sbr.rel (%p418) target = $region60
        $region59: #{esm_forward.1} parent=11 // pred_region
          _
        $region60: #{esm_forward.1} parent=11 // pred_fallthru
          _
        // Predicated region
        $region61: #{esm_forward.1} parent=11 // pred_check
          %p421 = pneg %p323
        $region62: #{esm_forward.1} parent=11 // pred_check_branch
          %423 = sbr.rel (%p421) target = $region64
        $region63: #{esm_forward.1} parent=11 // pred_region
          _
        $region64: #{esm_forward.1} parent=11 // pred_fallthru
          _
        // Predicated region
        $region65: #{esm_forward.1} parent=11 // pred_check
          %p424 = pneg %p344
        $region66: #{esm_forward.1} parent=11 // pred_check_branch
          %426 = sbr.rel (%p424) target = $region68
        $region67: #{esm_forward.1} parent=11 // pred_region
          _
        $region68: #{esm_forward.1} parent=11 // pred_fallthru
          _
      $region12: #{esm_forward.1} parent=5 // pred_fallthru
        _
      %p427 = scmp.lt.s32.totalorder %s24, 2
      // Predicated region
      $region69: #{esm_forward.1} parent=5 // pred_check
        %p428 = pneg %p427
      $region70: #{esm_forward.1} parent=5 // pred_check_branch
        %430 = sbr.rel (%p428) target = $region72
      $region71: #{esm_forward.1} parent=5 // pred_region
        // Predicated region
        $region73: #{esm_forward.1} parent=71 // pred_check
          %p431 = pneg %p44
        $region74: #{esm_forward.1} parent=71 // pred_check_branch
          %433 = sbr.rel (%p431) target = $region76
        $region75: #{esm_forward.1} parent=71 // pred_region
          %p434 = scmp.lt.s32.totalorder %s24, 1
          %s435 = scalar_select %p434, %s24, 1
          %s436 = smul.addr %s435, 8
          %s437 = scalar_lea.vmem %s0, %s436
        $region76: #{esm_forward.1} parent=71 // pred_fallthru
          _
      $region72: #{esm_forward.1} parent=5 // pred_fallthru
        _
      %p438 = scmp.le.s32.totalorder 1, %s24
      %p439 = scmp.lt.s32.totalorder %s24, 3
      %p440 = pnand %p438, %p439
      %p441 = pneg %p440
      // Predicated region
      $region77: #{esm_forward.1} parent=5 // pred_check
        _
      $region78: #{esm_forward.1} parent=5 // pred_check_branch
        %443 = sbr.rel (%p440) target = $region80
      $region79: #{esm_forward.1} parent=5 // pred_region
        %s444 = ssub.s32 %s24, 1
        %p445 = scmp.lt.s32.totalorder %s29, 1
        %s446 = scalar_select %p445, %s29, 1
        %s447 = smul.addr %s446, 8
        %s448 = scalar_lea.vmem %s0, %s447
        %p449 = pneg %p50
        %p450 = pneg %p47
        %p451 = pneg %p71
        %p452 = pneg %p68
        %p453 = pneg %p92
        %p454 = pneg %p89
        %p455 = pneg %p113
        %p456 = pneg %p110
        %p457 = pneg %p134
        %p458 = pneg %p131
        %p459 = pneg %p155
        %p460 = pneg %p152
        %p461 = pneg %p176
        %p462 = pneg %p173
        %p463 = pneg %p197
        %p464 = pneg %p194
        %p465 = pneg %p218
        %p466 = pneg %p215
        %p467 = pneg %p239
        %p468 = pneg %p236
        %p469 = pneg %p260
        %p470 = pneg %p257
        %p471 = pneg %p281
        %p472 = pneg %p278
        %p473 = pneg %p302
        %p474 = pneg %p299
        %p475 = pneg %p323
        %p476 = pneg %p320
        %p477 = pneg %p344
        %p478 = pneg %p341
        %p479 = pneg %p370
        %p480 = pneg %p367
        %s481 = sand.u32 %s357, 1
        %s482 = scalar_lea.sflag [#allocation3], %s481
        %s483 = sand.u32 %s357, 1
        %s484 = smul.addr %s483, 8
        %s485 = scalar_lea.vmem [#allocation2], %s484
        %p486 = scmp.lt.s32.totalorder %s29, 1
        %s487 = scalar_select %p486, %s29, 1
        %s488 = smul.addr %s487, 8
        %s489 = scalar_lea.vmem %s0, %s488
        %v491 = vld [vmem:[%s489] sm:$0xff]
        %v492 = vld [vmem:[%s1] sm:$0x1]
        %v493 = vld [vmem:[%s2] sm:$0x1]
        %vm494 = vcmask 261120
        %v495 = vsel %vm494, %v491, 0.0
        %496 = vadd.xlane.f32.xlu0 %v495
        %v497 = vpop.xlane.xlu0 %496
        %v498 = vrcp.pop 32.0
        %v499 = vmul.f32 32.0, %v498
        %v500 = vsub.f32 1.0, %v499
        %v501 = vmul.f32 %v498, %v500
        %v502 = vadd.f32 %v498, %v501
        %vm503 = vweird.f32 %v498
        %v504 = vsel %vm503, %v498, %v502
        %v505 = vmul.f32 %v497, %v504
        %v506 = vsub.f32 %v491, %v505
        %v507 = vmul.f32 %v506, %v506
        %v508 = vsel %vm494, %v507, 0.0
        %509 = vadd.xlane.f32.xlu0 %v508
        %v510 = vpop.xlane.xlu0 %509
        %v511 = vmul.f32 %v510, %v504
        %v512 = vadd.f32 %v511, 1e-05
        %v513 = vrsqrt.pop %v512
        %v514 = vmul.f32 %v513, %v512
        %v515 = vmul.f32 %v514, %v513
        %v516 = vmul.f32 0.5, %v515
        %v517 = vsub.f32 1.5, %v516
        %v518 = vmul.f32 %v513, %v517
        %vm519 = vweird.f32 %v512
        %vm520 = vweird.f32 %v513
        %vm521 = vmor %vm519, %vm520
        %v522 = vsel %vm521, %v513, %v518
        %v523 = vmul.f32 %v506, %v522
        %v525 = vperm.slane %v492, 0
        %v527 = vmul.f32 %v523, %v525
        %v529 = vperm.slane %v493, 0
        %v531 = vadd.f32 %v527, %v529
        %v532 = vpack.c.bf16 %v531, %v531
        %v533 = vld [vmem:[%s3] sm:$0xf]
        %v534 = vld [vmem:[%s3 + $0x4] sm:$0xf]
        %v535 = vld [vmem:[%s3 + $0x8] sm:$0xf]
        %v536 = vld [vmem:[%s3 + $0xc] sm:$0xf]
        %v537 = vld [vmem:[%s4] sm:$0x1]
        %v539 = vperm.slane %v537, 0
        %v545 = vunpack.c.l.b16 %v533
        %v546 = vunpack.c.l.b16 %v534
        %v547 = vunpack.c.l.b16 %v535
        %v548 = vunpack.c.l.b16 %v536
        %v549 = vpack.c.b16 %v546, %v545
        %v550 = vpack.c.b16 %v548, %v547
        %v554 = vsel %vm494, %v532, 0
        %556 = vmatpush.bf16.msra.mxu0 0
        %557 = vmatpush.bf16.msra.mxu0 0
        %558 = vmatpush.bf16.msra.mxu0 0
        %559 = vmatpush.bf16.msra.mxu0 0
        %560 = vmatpush.bf16.msra.mxu0 0
        %561 = vmatpush.bf16.msra.mxu0 0
        %562 = vmatpush.bf16.msra.mxu0 %v550
        %563 = vmatpush.bf16.msra.mxu0 %v549
        %564 = vmatmul.bf16.gmra.mxu0 %v554
        %v565 = vpop.f32.mrf.mxu0
        %v566 = vadd.f32 %v539, %v565
        %v567 = vpop.f32.mrf.mxu0
        %568 = vdwg.mxu0
        %570 = vrot.lane.b32.xlu0 %v566, 120
        %v571 = vpop.permute.xlu0 %570
        %573 = vrot.lane.b32.xlu0 %v566, 112
        %v574 = vpop.permute.xlu0 %573
        %576 = vrot.lane.b32.xlu0 %v566, 104
        %v577 = vpop.permute.xlu0 %576
        %v579 = vrot.slane %v574, 4
        %vm580 = vcmask 1047556
        %v581 = vsel %vm580, %v579, %v566
        %v582 = vrot.slane %v566, 4
        %v583 = vsel %vm580, %v574, %v582
        %v585 = vunpack.c.l.s4 1983009808
        %v586 = vunpack.c.0.s8 %v585
        %v587 = vperm.slane %v581, %v586
        %v589 = vunpack.c.l.s4 1983009808
        %v590 = vunpack.c.0.s8 %v589
        %v591 = vperm.slane %v583, %v590
        %v592 = vrot.slane %v577, 4
        %v593 = vsel %vm580, %v592, %v571
        %v594 = vrot.slane %v571, 4
        %v595 = vsel %vm580, %v577, %v594
        %v597 = vunpack.c.l.s4 1983009808
        %v598 = vunpack.c.0.s8 %v597
        %v599 = vperm.slane %v593, %v598
        %v601 = vunpack.c.l.s4 1983009808
        %v602 = vunpack.c.0.s8 %v601
        %v603 = vperm.slane %v595, %v602
        %v604 = vrot.slane %v599, 4
        %v605 = vsel %vm580, %v604, %v587
        %v606 = vrot.slane %v587, 4
        %v607 = vsel %vm580, %v599, %v606
        %v609 = vunpack.c.l.s4 1934713408
        %v610 = vunpack.c.0.s8 %v609
        %v611 = vperm.slane %v605, %v610
        %v613 = vunpack.c.l.s4 1934713408
        %v614 = vunpack.c.0.s8 %v613
        %v615 = vperm.slane %v607, %v614
        %v616 = vrot.slane %v603, 4
        %v617 = vsel %vm580, %v616, %v591
        %v618 = vrot.slane %v591, 4
        %v619 = vsel %vm580, %v603, %v618
        %v621 = vunpack.c.l.s4 1934713408
        %v622 = vunpack.c.0.s8 %v621
        %v623 = vperm.slane %v617, %v622
        %v625 = vunpack.c.l.s4 1934713408
        %v626 = vunpack.c.0.s8 %v625
        %v627 = vperm.slane %v619, %v626
        %v628 = vrot.slane %v611, 4
        %v629 = vsel %vm580, 0.0, %v628
        %v630 = vrot.slane %v615, 4
        %v631 = vsel %vm580, 0.0, %v630
        %v632 = vrot.slane %v623, 4
        %v633 = vsel %vm580, 0.0, %v632
        %v634 = vrot.slane %v627, 4
        %v635 = vsel %vm580, 0.0, %v634
        %v636 = vsel %vm580, %v630, %v611
        %v638 = vunpack.c.l.s4 1983009808
        %v639 = vunpack.c.0.s8 %v638
        %v640 = vperm.slane %v636, %v639
        %v641 = vrot.slane %v631, 4
        %v642 = vsel %vm580, %v641, %v629
        %v644 = vunpack.c.l.s4 1983009808
        %v645 = vunpack.c.0.s8 %v644
        %v646 = vperm.slane %v642, %v645
        %v647 = vsel %vm580, %v634, %v623
        %v649 = vunpack.c.l.s4 1983009808
        %v650 = vunpack.c.0.s8 %v649
        %v651 = vperm.slane %v647, %v650
        %v652 = vrot.slane %v635, 4
        %v653 = vsel %vm580, %v652, %v633
        %v655 = vunpack.c.l.s4 1983009808
        %v656 = vunpack.c.0.s8 %v655
        %v657 = vperm.slane %v653, %v656
        %v658 = vrot.slane %v646, 4
        %v659 = vsel %vm580, %v658, %v640
        %v660 = vrot.slane %v640, 4
        %v661 = vsel %vm580, %v646, %v660
        %v663 = vunpack.c.l.s4 1934713408
        %v664 = vunpack.c.0.s8 %v663
        %v665 = vperm.slane %v659, %v664
        %v667 = vunpack.c.l.s4 1934713408
        %v668 = vunpack.c.0.s8 %v667
        %v669 = vperm.slane %v661, %v668
        %v670 = vrot.slane %v657, 4
        %v671 = vsel %vm580, %v670, %v651
        %v672 = vrot.slane %v651, 4
        %v673 = vsel %vm580, %v657, %v672
        %v675 = vunpack.c.l.s4 1934713408
        %v676 = vunpack.c.0.s8 %v675
        %v677 = vperm.slane %v671, %v676
        %v679 = vunpack.c.l.s4 1934713408
        %v680 = vunpack.c.0.s8 %v679
        %v681 = vperm.slane %v673, %v680
        %v682 = vrot.slane %v677, 4
        %v683 = vsel %vm580, %v682, %v665
        %v684 = vrot.slane %v665, 4
        %v685 = vsel %vm580, %v677, %v684
        %v686 = vrot.slane %v681, 4
        %v687 = vsel %vm580, %v686, %v669
        %v688 = vrot.slane %v669, 4
        %v689 = vsel %vm580, %v681, %v688
        %690 = vrot.lane.b32.xlu0 %v566, 96
        %v691 = vpop.permute.xlu0 %690
        %692 = vrot.lane.b32.xlu0 %v571, 96
        %v693 = vpop.permute.xlu0 %692
        %694 = vrot.lane.b32.xlu0 %v574, 96
        %v695 = vpop.permute.xlu0 %694
        %696 = vrot.lane.b32.xlu0 %v577, 96
        %v697 = vpop.permute.xlu0 %696
        %v702 = vrot.slane %v695, 4
        %v703 = vsel %vm580, %v702, %v691
        %v704 = vrot.slane %v691, 4
        %v705 = vsel %vm580, %v695, %v704
        %v707 = vunpack.c.l.s4 1983009808
        %v708 = vunpack.c.0.s8 %v707
        %v709 = vperm.slane %v703, %v708
        %v711 = vunpack.c.l.s4 1983009808
        %v712 = vunpack.c.0.s8 %v711
        %v713 = vperm.slane %v705, %v712
        %v714 = vrot.slane %v697, 4
        %v715 = vsel %vm580, %v714, %v693
        %v716 = vrot.slane %v693, 4
        %v717 = vsel %vm580, %v697, %v716
        %v719 = vunpack.c.l.s4 1983009808
        %v720 = vunpack.c.0.s8 %v719
        %v721 = vperm.slane %v715, %v720
        %v723 = vunpack.c.l.s4 1983009808
        %v724 = vunpack.c.0.s8 %v723
        %v725 = vperm.slane %v717, %v724
        %v726 = vrot.slane %v721, 4
        %v727 = vsel %vm580, %v726, %v709
        %v728 = vrot.slane %v709, 4
        %v729 = vsel %vm580, %v721, %v728
        %v731 = vunpack.c.l.s4 1934713408
        %v732 = vunpack.c.0.s8 %v731
        %v733 = vperm.slane %v727, %v732
        %v735 = vunpack.c.l.s4 1934713408
        %v736 = vunpack.c.0.s8 %v735
        %v737 = vperm.slane %v729, %v736
        %v738 = vrot.slane %v725, 4
        %v739 = vsel %vm580, %v738, %v713
        %v740 = vrot.slane %v713, 4
        %v741 = vsel %vm580, %v725, %v740
        %v743 = vunpack.c.l.s4 1934713408
        %v744 = vunpack.c.0.s8 %v743
        %v745 = vperm.slane %v739, %v744
        %v747 = vunpack.c.l.s4 1934713408
        %v748 = vunpack.c.0.s8 %v747
        %v749 = vperm.slane %v741, %v748
        %v750 = vrot.slane %v733, 4
        %v751 = vsel %vm580, 0.0, %v750
        %v752 = vrot.slane %v737, 4
        %v753 = vsel %vm580, 0.0, %v752
        %v754 = vrot.slane %v745, 4
        %v755 = vsel %vm580, 0.0, %v754
        %v756 = vrot.slane %v749, 4
        %v757 = vsel %vm580, 0.0, %v756
        %v758 = vsel %vm580, %v752, %v733
        %v760 = vunpack.c.l.s4 1983009808
        %v761 = vunpack.c.0.s8 %v760
        %v762 = vperm.slane %v758, %v761
        %v763 = vrot.slane %v753, 4
        %v764 = vsel %vm580, %v763, %v751
        %v766 = vunpack.c.l.s4 1983009808
        %v767 = vunpack.c.0.s8 %v766
        %v768 = vperm.slane %v764, %v767
        %v769 = vsel %vm580, %v756, %v745
        %v771 = vunpack.c.l.s4 1983009808
        %v772 = vunpack.c.0.s8 %v771
        %v773 = vperm.slane %v769, %v772
        %v774 = vrot.slane %v757, 4
        %v775 = vsel %vm580, %v774, %v755
        %v777 = vunpack.c.l.s4 1983009808
        %v778 = vunpack.c.0.s8 %v777
        %v779 = vperm.slane %v775, %v778
        %v780 = vrot.slane %v768, 4
        %v781 = vsel %vm580, %v780, %v762
        %v782 = vrot.slane %v762, 4
        %v783 = vsel %vm580, %v768, %v782
        %v785 = vunpack.c.l.s4 1934713408
        %v786 = vunpack.c.0.s8 %v785
        %v787 = vperm.slane %v781, %v786
        %v789 = vunpack.c.l.s4 1934713408
        %v790 = vunpack.c.0.s8 %v789
        %v791 = vperm.slane %v783, %v790
        %v792 = vrot.slane %v779, 4
        %v793 = vsel %vm580, %v792, %v773
        %v794 = vrot.slane %v773, 4
        %v795 = vsel %vm580, %v779, %v794
        %v797 = vunpack.c.l.s4 1934713408
        %v798 = vunpack.c.0.s8 %v797
        %v799 = vperm.slane %v793, %v798
        %v801 = vunpack.c.l.s4 1934713408
        %v802 = vunpack.c.0.s8 %v801
        %v803 = vperm.slane %v795, %v802
        %v804 = vrot.slane %v799, 4
        %v805 = vsel %vm580, %v804, %v787
        %v806 = vrot.slane %v787, 4
        %v807 = vsel %vm580, %v799, %v806
        %v808 = vrot.slane %v803, 4
        %v809 = vsel %vm580, %v808, %v791
        %v810 = vrot.slane %v791, 4
        %v811 = vsel %vm580, %v803, %v810
        %812 = vrot.lane.b32.xlu0 %v566, 64
        %v813 = vpop.permute.xlu0 %812
        %814 = vrot.lane.b32.xlu0 %v571, 64
        %v815 = vpop.permute.xlu0 %814
        %816 = vrot.lane.b32.xlu0 %v574, 64
        %v817 = vpop.permute.xlu0 %816
        %818 = vrot.lane.b32.xlu0 %v577, 64
        %v819 = vpop.permute.xlu0 %818
        %v824 = vrot.slane %v817, 4
        %v825 = vsel %vm580, %v824, %v813
        %v826 = vrot.slane %v813, 4
        %v827 = vsel %vm580, %v817, %v826
        %v829 = vunpack.c.l.s4 1983009808
        %v830 = vunpack.c.0.s8 %v829
        %v831 = vperm.slane %v825, %v830
        %v833 = vunpack.c.l.s4 1983009808
        %v834 = vunpack.c.0.s8 %v833
        %v835 = vperm.slane %v827, %v834
        %v836 = vrot.slane %v819, 4
        %v837 = vsel %vm580, %v836, %v815
        %v838 = vrot.slane %v815, 4
        %v839 = vsel %vm580, %v819, %v838
        %v841 = vunpack.c.l.s4 1983009808
        %v842 = vunpack.c.0.s8 %v841
        %v843 = vperm.slane %v837, %v842
        %v845 = vunpack.c.l.s4 1983009808
        %v846 = vunpack.c.0.s8 %v845
        %v847 = vperm.slane %v839, %v846
        %v848 = vrot.slane %v843, 4
        %v849 = vsel %vm580, %v848, %v831
        %v850 = vrot.slane %v831, 4
        %v851 = vsel %vm580, %v843, %v850
        %v853 = vunpack.c.l.s4 1934713408
        %v854 = vunpack.c.0.s8 %v853
        %v855 = vperm.slane %v849, %v854
        %v857 = vunpack.c.l.s4 1934713408
        %v858 = vunpack.c.0.s8 %v857
        %v859 = vperm.slane %v851, %v858
        %v860 = vrot.slane %v847, 4
        %v861 = vsel %vm580, %v860, %v835
        %v862 = vrot.slane %v835, 4
        %v863 = vsel %vm580, %v847, %v862
        %v865 = vunpack.c.l.s4 1934713408
        %v866 = vunpack.c.0.s8 %v865
        %v867 = vperm.slane %v861, %v866
        %v869 = vunpack.c.l.s4 1934713408
        %v870 = vunpack.c.0.s8 %v869
        %v871 = vperm.slane %v863, %v870
        %v872 = vrot.slane %v855, 4
        %v873 = vsel %vm580, 0.0, %v872
        %v874 = vrot.slane %v859, 4
        %v875 = vsel %vm580, 0.0, %v874
        %v876 = vrot.slane %v867, 4
        %v877 = vsel %vm580, 0.0, %v876
        %v878 = vrot.slane %v871, 4
        %v879 = vsel %vm580, 0.0, %v878
        %v880 = vsel %vm580, %v874, %v855
        %v882 = vunpack.c.l.s4 1983009808
        %v883 = vunpack.c.0.s8 %v882
        %v884 = vperm.slane %v880, %v883
        %v885 = vrot.slane %v875, 4
        %v886 = vsel %vm580, %v885, %v873
        %v888 = vunpack.c.l.s4 1983009808
        %v889 = vunpack.c.0.s8 %v888
        %v890 = vperm.slane %v886, %v889
        %v891 = vsel %vm580, %v878, %v867
        %v893 = vunpack.c.l.s4 1983009808
        %v894 = vunpack.c.0.s8 %v893
        %v895 = vperm.slane %v891, %v894
        %v896 = vrot.slane %v879, 4
        %v897 = vsel %vm580, %v896, %v877
        %v899 = vunpack.c.l.s4 1983009808
        %v900 = vunpack.c.0.s8 %v899
        %v901 = vperm.slane %v897, %v900
        %v902 = vrot.slane %v890, 4
        %v903 = vsel %vm580, %v902, %v884
        %v904 = vrot.slane %v884, 4
        %v905 = vsel %vm580, %v890, %v904
        %v907 = vunpack.c.l.s4 1934713408
        %v908 = vunpack.c.0.s8 %v907
        %v909 = vperm.slane %v903, %v908
        %v911 = vunpack.c.l.s4 1934713408
        %v912 = vunpack.c.0.s8 %v911
        %v913 = vperm.slane %v905, %v912
        %v914 = vrot.slane %v901, 4
        %v915 = vsel %vm580, %v914, %v895
        %v916 = vrot.slane %v895, 4
        %v917 = vsel %vm580, %v901, %v916
        %v919 = vunpack.c.l.s4 1934713408
        %v920 = vunpack.c.0.s8 %v919
        %v921 = vperm.slane %v915, %v920
        %v923 = vunpack.c.l.s4 1934713408
        %v924 = vunpack.c.0.s8 %v923
        %v925 = vperm.slane %v917, %v924
        %v926 = vrot.slane %v921, 4
        %v927 = vsel %vm580, %v926, %v909
        %v928 = vrot.slane %v909, 4
        %v929 = vsel %vm580, %v921, %v928
        %v930 = vrot.slane %v925, 4
        %v931 = vsel %vm580, %v930, %v913
        %v932 = vrot.slane %v913, 4
        %v933 = vsel %vm580, %v925, %v932
        %v934 = vpack.c.bf16 %v683, %v683
        %v935 = vpack.c.bf16 %v685, %v685
        %v936 = vpack.c.bf16 %v687, %v687
        %v937 = vpack.c.bf16 %v689, %v689
        %v938 = vpack.c.bf16 %v805, %v805
        %v939 = vpack.c.bf16 %v807, %v807
        %v940 = vpack.c.bf16 %v809, %v809
        %v941 = vpack.c.bf16 %v811, %v811
        %vm942 = vcmask 64512
        %v944 = vsel %vm942, %v934, 0
        %v947 = vsel %vm942, %v938, 0
        %949 = vmatpush.bf16.xpose.msra.mxu0 0
        %950 = vmatpush.bf16.xpose.msra.mxu0 0
        %951 = vmatpush.bf16.xpose.msra.mxu0 0
        %952 = vmatpush.bf16.xpose.msra.mxu0 0
        %953 = vmatpush.bf16.xpose.msra.mxu0 0
        %954 = vmatpush.bf16.xpose.msra.mxu0 0
        %955 = vmatpush.bf16.xpose.msra.mxu0 0
        %956 = vmatpush.bf16.xpose.msra.mxu0 %v947
        %957 = vmatmul.bf16.gmra.mxu0 %v944
        %v958 = vpop.f32.mrf.mxu0
        %v959 = vadd.f32 0.0, %v958
        %v960 = vpop.f32.mrf.mxu0
        %961 = vdwg.mxu0
        %v963 = vsel %vm942, %v935, 0
        %v966 = vsel %vm942, %v939, 0
        %968 = vmatpush.bf16.xpose.msra.mxu0 0
        %969 = vmatpush.bf16.xpose.msra.mxu0 0
        %970 = vmatpush.bf16.xpose.msra.mxu0 0
        %971 = vmatpush.bf16.xpose.msra.mxu0 0
        %972 = vmatpush.bf16.xpose.msra.mxu0 0
        %973 = vmatpush.bf16.xpose.msra.mxu0 0
        %974 = vmatpush.bf16.xpose.msra.mxu0 0
        %975 = vmatpush.bf16.xpose.msra.mxu0 %v966
        %976 = vmatmul.bf16.gmra.mxu0 %v963
        %v977 = vpop.f32.mrf.mxu0
        %v978 = vadd.f32 0.0, %v977
        %v979 = vpop.f32.mrf.mxu0
        %980 = vdwg.mxu0
        %v982 = vsel %vm942, %v936, 0
        %v985 = vsel %vm942, %v940, 0
        %987 = vmatpush.bf16.xpose.msra.mxu0 0
        %988 = vmatpush.bf16.xpose.msra.mxu0 0
        %989 = vmatpush.bf16.xpose.msra.mxu0 0
        %990 = vmatpush.bf16.xpose.msra.mxu0 0
        %991 = vmatpush.bf16.xpose.msra.mxu0 0
        %992 = vmatpush.bf16.xpose.msra.mxu0 0
        %993 = vmatpush.bf16.xpose.msra.mxu0 0
        %994 = vmatpush.bf16.xpose.msra.mxu0 %v985
        %995 = vmatmul.bf16.gmra.mxu0 %v982
        %v996 = vpop.f32.mrf.mxu0
        %v997 = vadd.f32 0.0, %v996
        %v998 = vpop.f32.mrf.mxu0
        %999 = vdwg.mxu0
        %v1001 = vsel %vm942, %v937, 0
        %v1004 = vsel %vm942, %v941, 0
        %1006 = vmatpush.bf16.xpose.msra.mxu0 0
        %1007 = vmatpush.bf16.xpose.msra.mxu0 0
        %1008 = vmatpush.bf16.xpose.msra.mxu0 0
        %1009 = vmatpush.bf16.xpose.msra.mxu0 0
        %1010 = vmatpush.bf16.xpose.msra.mxu0 0
        %1011 = vmatpush.bf16.xpose.msra.mxu0 0
        %1012 = vmatpush.bf16.xpose.msra.mxu0 0
        %1013 = vmatpush.bf16.xpose.msra.mxu0 %v1004
        %1014 = vmatmul.bf16.gmra.mxu0 %v1001
        %v1015 = vpop.f32.mrf.mxu0
        %v1016 = vadd.f32 0.0, %v1015
        %v1017 = vpop.f32.mrf.mxu0
        %1018 = vdwg.mxu0
        %v1019 = vsel %vm942, %v959, -inf
        %1020 = vmax.xlane.f32.xlu0 %v1019
        %v1021 = vpop.xlane.xlu0 %1020
        %v1022 = vsel %vm942, %v978, -inf
        %1023 = vmax.xlane.f32.xlu0 %v1022
        %v1024 = vpop.xlane.xlu0 %1023
        %v1025 = vsel %vm942, %v997, -inf
        %1026 = vmax.xlane.f32.xlu0 %v1025
        %v1027 = vpop.xlane.xlu0 %1026
        %v1028 = vsel %vm942, %v1016, -inf
        %1029 = vmax.xlane.f32.xlu0 %v1028
        %v1030 = vpop.xlane.xlu0 %1029
        %v1031 = vsub.f32 %v959, %v1021
        %v1032 = vsub.f32 %v978, %v1024
        %v1033 = vsub.f32 %v997, %v1027
        %v1034 = vsub.f32 %v1016, %v1030
        %v1035 = vmul.f32 %v1031, 1.442695
        %v1036 = vpow.pop %v1035
        %v1037 = vmul.f32 %v1032, 1.442695
        %v1038 = vpow.pop %v1037
        %v1039 = vmul.f32 %v1033, 1.442695
        %v1040 = vpow.pop %v1039
        %v1041 = vmul.f32 %v1034, 1.442695
        %v1042 = vpow.pop %v1041
        %v1043 = vsel %vm942, %v1036, 0.0
        %1044 = vadd.xlane.f32.xlu0 %v1043
        %v1045 = vpop.xlane.xlu0 %1044
        %v1046 = vsel %vm942, %v1038, 0.0
        %1047 = vadd.xlane.f32.xlu0 %v1046
        %v1048 = vpop.xlane.xlu0 %1047
        %v1049 = vsel %vm942, %v1040, 0.0
        %1050 = vadd.xlane.f32.xlu0 %v1049
        %v1051 = vpop.xlane.xlu0 %1050
        %v1052 = vsel %vm942, %v1042, 0.0
        %1053 = vadd.xlane.f32.xlu0 %v1052
        %v1054 = vpop.xlane.xlu0 %1053
        %v1055 = vrcp.pop %v1045
        %v1056 = vrcp.pop %v1048
        %v1057 = vrcp.pop %v1051
        %v1058 = vrcp.pop %v1054
        %v1059 = vmul.f32 %v1036, %v1055
        %v1060 = vmul.f32 %v1038, %v1056
        %v1061 = vmul.f32 %v1040, %v1057
        %v1062 = vmul.f32 %v1042, %v1058
        %v1063 = vpack.c.bf16 %v1059, %v1059
        %v1064 = vpack.c.bf16 %v1060, %v1060
        %v1065 = vpack.c.bf16 %v1061, %v1061
        %v1066 = vpack.c.bf16 %v1062, %v1062
        %v1067 = vpack.c.bf16 %v927, %v927
        %v1068 = vpack.c.bf16 %v929, %v929
        %v1069 = vpack.c.bf16 %v931, %v931
        %v1070 = vpack.c.bf16 %v933, %v933
        %v1072 = vsel %vm942, %v1063, 0
        %vm1074 = vcmask 1043456
        %v1076 = vsel %vm1074, %v1067, 0
        %1078 = vmatpush.bf16.msra.mxu0 0
        %1079 = vmatpush.bf16.msra.mxu0 0
        %1080 = vmatpush.bf16.msra.mxu0 0
        %1081 = vmatpush.bf16.msra.mxu0 0
        %1082 = vmatpush.bf16.msra.mxu0 0
        %1083 = vmatpush.bf16.msra.mxu0 0
        %1084 = vmatpush.bf16.msra.mxu0 0
        %1085 = vmatpush.bf16.msra.mxu0 %v1076
        %1086 = vmatmul.bf16.gmra.mxu0 %v1072
        %v1087 = vpop.f32.mrf.mxu0
        %v1088 = vadd.f32 0.0, %v1087
        %v1089 = vpop.f32.mrf.mxu0
        %1090 = vdwg.mxu0
        %v1092 = vsel %vm942, %v1064, 0
        %v1095 = vsel %vm1074, %v1068, 0
        %1097 = vmatpush.bf16.msra.mxu0 0
        %1098 = vmatpush.bf16.msra.mxu0 0
        %1099 = vmatpush.bf16.msra.mxu0 0
        %1100 = vmatpush.bf16.msra.mxu0 0
        %1101 = vmatpush.bf16.msra.mxu0 0
        %1102 = vmatpush.bf16.msra.mxu0 0
        %1103 = vmatpush.bf16.msra.mxu0 0
        %1104 = vmatpush.bf16.msra.mxu0 %v1095
        %1105 = vmatmul.bf16.gmra.mxu0 %v1092
        %v1106 = vpop.f32.mrf.mxu0
        %v1107 = vadd.f32 0.0, %v1106
        %v1108 = vpop.f32.mrf.mxu0
        %1109 = vdwg.mxu0
        %v1111 = vsel %vm942, %v1065, 0
        %v1114 = vsel %vm1074, %v1069, 0
        %1116 = vmatpush.bf16.msra.mxu0 0
        %1117 = vmatpush.bf16.msra.mxu0 0
        %1118 = vmatpush.bf16.msra.mxu0 0
        %1119 = vmatpush.bf16.msra.mxu0 0
        %1120 = vmatpush.bf16.msra.mxu0 0
        %1121 = vmatpush.bf16.msra.mxu0 0
        %1122 = vmatpush.bf16.msra.mxu0 0
        %1123 = vmatpush.bf16.msra.mxu0 %v1114
        %1124 = vmatmul.bf16.gmra.mxu0 %v1111
        %v1125 = vpop.f32.mrf.mxu0
        %v1126 = vadd.f32 0.0, %v1125
        %v1127 = vpop.f32.mrf.mxu0
        %1128 = vdwg.mxu0
        %v1130 = vsel %vm942, %v1066, 0
        %v1133 = vsel %vm1074, %v1070, 0
        %1135 = vmatpush.bf16.msra.mxu0 0
        %1136 = vmatpush.bf16.msra.mxu0 0
        %1137 = vmatpush.bf16.msra.mxu0 0
        %1138 = vmatpush.bf16.msra.mxu0 0
        %1139 = vmatpush.bf16.msra.mxu0 0
        %1140 = vmatpush.bf16.msra.mxu0 0
        %1141 = vmatpush.bf16.msra.mxu0 0
        %1142 = vmatpush.bf16.msra.mxu0 %v1133
        %1143 = vmatmul.bf16.gmra.mxu0 %v1130
        %v1144 = vpop.f32.mrf.mxu0
        %v1145 = vadd.f32 0.0, %v1144
        %v1146 = vpop.f32.mrf.mxu0
        %1147 = vdwg.mxu0
        %v1148 = vrot.slane %v1126, 4
        %v1149 = vsel %vm580, %v1148, %v1088
        %v1150 = vrot.slane %v1088, 4
        %v1151 = vsel %vm580, %v1126, %v1150
        %v1153 = vunpack.c.l.s4 1983009808
        %v1154 = vunpack.c.0.s8 %v1153
        %v1155 = vperm.slane %v1149, %v1154
        %v1157 = vunpack.c.l.s4 1983009808
        %v1158 = vunpack.c.0.s8 %v1157
        %v1159 = vperm.slane %v1151, %v1158
        %v1160 = vrot.slane %v1145, 4
        %v1161 = vsel %vm580, %v1160, %v1107
        %v1162 = vrot.slane %v1107, 4
        %v1163 = vsel %vm580, %v1145, %v1162
        %v1165 = vunpack.c.l.s4 1983009808
        %v1166 = vunpack.c.0.s8 %v1165
        %v1167 = vperm.slane %v1161, %v1166
        %v1169 = vunpack.c.l.s4 1983009808
        %v1170 = vunpack.c.0.s8 %v1169
        %v1171 = vperm.slane %v1163, %v1170
        %v1172 = vrot.slane %v1167, 4
        %v1173 = vsel %vm580, %v1172, %v1155
        %v1174 = vrot.slane %v1155, 4
        %v1175 = vsel %vm580, %v1167, %v1174
        %v1177 = vunpack.c.l.s4 1934713408
        %v1178 = vunpack.c.0.s8 %v1177
        %v1179 = vperm.slane %v1173, %v1178
        %v1181 = vunpack.c.l.s4 1934713408
        %v1182 = vunpack.c.0.s8 %v1181
        %v1183 = vperm.slane %v1175, %v1182
        %v1184 = vrot.slane %v1171, 4
        %v1185 = vsel %vm580, %v1184, %v1159
        %v1186 = vrot.slane %v1159, 4
        %v1187 = vsel %vm580, %v1171, %v1186
        %v1189 = vunpack.c.l.s4 1934713408
        %v1190 = vunpack.c.0.s8 %v1189
        %v1191 = vperm.slane %v1185, %v1190
        %v1193 = vunpack.c.l.s4 1934713408
        %v1194 = vunpack.c.0.s8 %v1193
        %v1195 = vperm.slane %v1187, %v1194
        %v1196 = vrot.slane %v1179, 4
        %v1197 = vsel %vm580, 0.0, %v1196
        %v1198 = vrot.slane %v1183, 4
        %v1199 = vsel %vm580, 0.0, %v1198
        %v1200 = vrot.slane %v1191, 4
        %v1201 = vsel %vm580, 0.0, %v1200
        %v1202 = vrot.slane %v1195, 4
        %v1203 = vsel %vm580, 0.0, %v1202
        %v1204 = vsel %vm580, %v1198, %v1179
        %v1206 = vunpack.c.l.s4 1983009808
        %v1207 = vunpack.c.0.s8 %v1206
        %v1208 = vperm.slane %v1204, %v1207
        %v1209 = vrot.slane %v1199, 4
        %v1210 = vsel %vm580, %v1209, %v1197
        %v1212 = vunpack.c.l.s4 1983009808
        %v1213 = vunpack.c.0.s8 %v1212
        %v1214 = vperm.slane %v1210, %v1213
        %v1215 = vsel %vm580, %v1202, %v1191
        %v1217 = vunpack.c.l.s4 1983009808
        %v1218 = vunpack.c.0.s8 %v1217
        %v1219 = vperm.slane %v1215, %v1218
        %v1220 = vrot.slane %v1203, 4
        %v1221 = vsel %vm580, %v1220, %v1201
        %v1223 = vunpack.c.l.s4 1983009808
        %v1224 = vunpack.c.0.s8 %v1223
        %v1225 = vperm.slane %v1221, %v1224
        %v1226 = vrot.slane %v1214, 4
        %v1227 = vsel %vm580, %v1226, %v1208
        %v1228 = vrot.slane %v1208, 4
        %v1229 = vsel %vm580, %v1214, %v1228
        %v1231 = vunpack.c.l.s4 1934713408
        %v1232 = vunpack.c.0.s8 %v1231
        %v1233 = vperm.slane %v1227, %v1232
        %v1235 = vunpack.c.l.s4 1934713408
        %v1236 = vunpack.c.0.s8 %v1235
        %v1237 = vperm.slane %v1229, %v1236
        %v1238 = vrot.slane %v1225, 4
        %v1239 = vsel %vm580, %v1238, %v1219
        %v1240 = vrot.slane %v1219, 4
        %v1241 = vsel %vm580, %v1225, %v1240
        %v1243 = vunpack.c.l.s4 1934713408
        %v1244 = vunpack.c.0.s8 %v1243
        %v1245 = vperm.slane %v1239, %v1244
        %v1247 = vunpack.c.l.s4 1934713408
        %v1248 = vunpack.c.0.s8 %v1247
        %v1249 = vperm.slane %v1241, %v1248
        %v1250 = vrot.slane %v1245, 4
        %v1251 = vsel %vm580, %v1250, %v1233
        %v1252 = vrot.slane %v1233, 4
        %v1253 = vsel %vm580, %v1245, %v1252
        %v1254 = vrot.slane %v1249, 4
        %v1255 = vsel %vm580, %v1254, %v1237
        %v1256 = vrot.slane %v1237, 4
        %v1257 = vsel %vm580, %v1249, %v1256
        %1259 = vrot.lane.b32.xlu0 %v1253, 8
        %v1260 = vpop.permute.xlu0 %1259
        %1263 = vrot.lane.b32.xlu0 %v1255, 16
        %v1264 = vpop.permute.xlu0 %1263
        %1267 = vrot.lane.b32.xlu0 %v1257, 24
        %v1268 = vpop.permute.xlu0 %1267
        %v1270 = vsel %vm942, %v1251, %v1260
        %vm1271 = vcmask 130048
        %v1272 = vsel %vm1271, %v1270, %v1264
        %vm1273 = vcmask 195584
        %v1274 = vsel %vm1273, %v1272, %v1268
        %v1275 = vpack.c.bf16 %v1274, %v1274
        %v1276 = vld [vmem:[%s5] sm:$0xf]
        %v1277 = vld [vmem:[%s5 + $0x4] sm:$0xf]
        %v1278 = vld [vmem:[%s5 + $0x8] sm:$0xf]
        %v1279 = vld [vmem:[%s5 + $0xc] sm:$0xf]
        %v1280 = vld [vmem:[%s6] sm:$0x1]
        %v1282 = vperm.slane %v1280, 0
        %v1288 = vunpack.c.l.b16 %v1276
        %v1289 = vunpack.c.l.b16 %v1277
        %v1290 = vunpack.c.l.b16 %v1278
        %v1291 = vunpack.c.l.b16 %v1279
        %v1292 = vpack.c.b16 %v1289, %v1288
        %v1293 = vpack.c.b16 %v1291, %v1290
        %v1297 = vsel %vm494, %v1275, 0
        %1299 = vmatpush.bf16.msra.mxu0 0
        %1300 = vmatpush.bf16.msra.mxu0 0
        %1301 = vmatpush.bf16.msra.mxu0 0
        %1302 = vmatpush.bf16.msra.mxu0 0
        %1303 = vmatpush.bf16.msra.mxu0 0
        %1304 = vmatpush.bf16.msra.mxu0 0
        %1305 = vmatpush.bf16.msra.mxu0 %v1293
        %1306 = vmatpush.bf16.msra.mxu0 %v1292
        %1307 = vmatmul.bf16.gmra.mxu0 %v1297
        %v1308 = vpop.f32.mrf.mxu0
        %v1309 = vadd.f32 %v1282, %v1308
        %v1310 = vpop.f32.mrf.mxu0
        %1311 = vdwg.mxu0
        %v1312 = vadd.f32 %v491, %v1309
        %v1313 = vld [vmem:[%s7] sm:$0x1]
        %v1314 = vld [vmem:[%s8] sm:$0x1]
        %v1315 = vsel %vm494, %v1312, 0.0
        %1316 = vadd.xlane.f32.xlu0 %v1315
        %v1317 = vpop.xlane.xlu0 %1316
        %v1318 = vmul.f32 %v1317, %v504
        %v1319 = vsub.f32 %v1312, %v1318
        %v1320 = vmul.f32 %v1319, %v1319
        %v1321 = vsel %vm494, %v1320, 0.0
        %1322 = vadd.xlane.f32.xlu0 %v1321
        %v1323 = vpop.xlane.xlu0 %1322
        %v1324 = vmul.f32 %v1323, %v504
        %v1325 = vadd.f32 %v1324, 1e-05
        %v1326 = vrsqrt.pop %v1325
        %v1327 = vmul.f32 %v1326, %v1325
        %v1328 = vmul.f32 %v1327, %v1326
        %v1329 = vmul.f32 0.5, %v1328
        %v1330 = vsub.f32 1.5, %v1329
        %v1331 = vmul.f32 %v1326, %v1330
        %vm1332 = vweird.f32 %v1325
        %vm1333 = vweird.f32 %v1326
        %vm1334 = vmor %vm1332, %vm1333
        %v1335 = vsel %vm1334, %v1326, %v1331
        %v1336 = vmul.f32 %v1319, %v1335
        %v1338 = vperm.slane %v1313, 0
        %v1340 = vmul.f32 %v1336, %v1338
        %v1342 = vperm.slane %v1314, 0
        %v1344 = vadd.f32 %v1340, %v1342
        %v1345 = vpack.c.bf16 %v1344, %v1344
        %v1346 = vld [vmem:[%s9] sm:$0xf]
        %v1347 = vld [vmem:[%s9 + $0x4] sm:$0xf]
        %v1348 = vld [vmem:[%s9 + $0x8] sm:$0xf]
        %v1349 = vld [vmem:[%s9 + $0xc] sm:$0xf]
        %v1350 = vld [vmem:[%s10] sm:$0x1]
        %v1352 = vperm.slane %v1350, 0
        %v1358 = vunpack.c.l.b16 %v1346
        %v1359 = vunpack.c.l.b16 %v1347
        %v1360 = vunpack.c.l.b16 %v1348
        %v1361 = vunpack.c.l.b16 %v1349
        %v1362 = vpack.c.b16 %v1359, %v1358
        %v1363 = vpack.c.b16 %v1361, %v1360
        %v1367 = vsel %vm494, %v1345, 0
        %1369 = vmatpush.bf16.msra.mxu0 0
        %1370 = vmatpush.bf16.msra.mxu0 0
        %1371 = vmatpush.bf16.msra.mxu0 0
        %1372 = vmatpush.bf16.msra.mxu0 0
        %1373 = vmatpush.bf16.msra.mxu0 0
        %1374 = vmatpush.bf16.msra.mxu0 0
        %1375 = vmatpush.bf16.msra.mxu0 %v1363
        %1376 = vmatpush.bf16.msra.mxu0 %v1362
        %1377 = vmatmul.bf16.gmra.mxu0 %v1367
        %v1378 = vpop.f32.mrf.mxu0
        %v1379 = vadd.f32 %v1352, %v1378
        %v1380 = vpop.f32.mrf.mxu0
        %1381 = vdwg.mxu0
        %v1382 = vmul.f32 %v1379, %v1379
        %v1383 = vmul.f32 %v1379, %v1382
        %v1384 = vmul.f32 %v1383, 0.044715
        %v1385 = vadd.f32 %v1379, %v1384
        %v1386 = vmul.f32 %v1385, 0.7978846
        %v1387 = vtanh.pop %v1386
        %v1388 = vadd.f32 %v1387, 1.0
        %v1389 = vmul.f32 %v1388, 0.5
        %v1390 = vmul.f32 %v1379, %v1389
        %v1391 = vpack.c.bf16 %v1390, %v1390
        %v1392 = vld [vmem:[%s11] sm:$0xf]
        %v1393 = vld [vmem:[%s11 + $0x4] sm:$0xf]
        %v1394 = vld [vmem:[%s11 + $0x8] sm:$0xf]
        %v1395 = vld [vmem:[%s11 + $0xc] sm:$0xf]
        %v1396 = vld [vmem:[%s11 + $0x10] sm:$0xf]
        %v1397 = vld [vmem:[%s11 + $0x14] sm:$0xf]
        %v1398 = vld [vmem:[%s11 + $0x18] sm:$0xf]
        %v1399 = vld [vmem:[%s11 + $0x1c] sm:$0xf]
        %v1400 = vld [vmem:[%s11 + $0x20] sm:$0xf]
        %v1401 = vld [vmem:[%s11 + $0x24] sm:$0xf]
        %v1402 = vld [vmem:[%s11 + $0x28] sm:$0xf]
        %v1403 = vld [vmem:[%s11 + $0x2c] sm:$0xf]
        %v1404 = vld [vmem:[%s11 + $0x30] sm:$0xf]
        %v1405 = vld [vmem:[%s11 + $0x34] sm:$0xf]
        %v1406 = vld [vmem:[%s11 + $0x38] sm:$0xf]
        %v1407 = vld [vmem:[%s11 + $0x3c] sm:$0xf]
        %v1408 = vld [vmem:[%s12] sm:$0x1]
        %v1410 = vperm.slane %v1408, 0
        %v1428 = vunpack.c.l.b16 %v1392
        %v1429 = vunpack.c.l.b16 %v1393
        %v1430 = vunpack.c.l.b16 %v1394
        %v1431 = vunpack.c.l.b16 %v1395
        %v1432 = vunpack.c.l.b16 %v1396
        %v1433 = vunpack.c.l.b16 %v1397
        %v1434 = vunpack.c.l.b16 %v1398
        %v1435 = vunpack.c.l.b16 %v1399
        %v1436 = vunpack.c.l.b16 %v1400
        %v1437 = vunpack.c.l.b16 %v1401
        %v1438 = vunpack.c.l.b16 %v1402
        %v1439 = vunpack.c.l.b16 %v1403
        %v1440 = vunpack.c.l.b16 %v1404
        %v1441 = vunpack.c.l.b16 %v1405
        %v1442 = vunpack.c.l.b16 %v1406
        %v1443 = vunpack.c.l.b16 %v1407
        %v1444 = vpack.c.b16 %v1429, %v1428
        %v1445 = vpack.c.b16 %v1431, %v1430
        %v1446 = vpack.c.b16 %v1433, %v1432
        %v1447 = vpack.c.b16 %v1435, %v1434
        %v1448 = vpack.c.b16 %v1437, %v1436
        %v1449 = vpack.c.b16 %v1439, %v1438
        %v1450 = vpack.c.b16 %v1441, %v1440
        %v1451 = vpack.c.b16 %v1443, %v1442
        %1460 = vmatpush.bf16.msra.mxu0 %v1451
        %1461 = vmatpush.bf16.msra.mxu0 %v1450
        %1462 = vmatpush.bf16.msra.mxu0 %v1449
        %1463 = vmatpush.bf16.msra.mxu0 %v1448
        %1464 = vmatpush.bf16.msra.mxu0 %v1447
        %1465 = vmatpush.bf16.msra.mxu0 %v1446
        %1466 = vmatpush.bf16.msra.mxu0 %v1445
        %1467 = vmatpush.bf16.msra.mxu0 %v1444
        %1468 = vmatmul.bf16.gmra.mxu0 %v1391
        %v1469 = vpop.f32.mrf.mxu0
        %v1470 = vadd.f32 %v1410, %v1469
        %v1471 = vpop.f32.mrf.mxu0
        %1472 = vdwg.mxu0
        %v1473 = vadd.f32 %v1312, %v1470
        %s1474 = scalar_lea.vmem %s1, 1
        %v1475 = vld [vmem:[%s1474] sm:$0x1]
        %s1476 = scalar_lea.vmem %s2, 1
        %v1477 = vld [vmem:[%s1476] sm:$0x1]
        %v1478 = vsel %vm494, %v1473, 0.0
        %1479 = vadd.xlane.f32.xlu0 %v1478
        %v1480 = vpop.xlane.xlu0 %1479
        %v1481 = vmul.f32 %v1480, %v504
        %v1482 = vsub.f32 %v1473, %v1481
        %v1483 = vmul.f32 %v1482, %v1482
        %v1484 = vsel %vm494, %v1483, 0.0
        %1485 = vadd.xlane.f32.xlu0 %v1484
        %v1486 = vpop.xlane.xlu0 %1485
        %v1487 = vmul.f32 %v1486, %v504
        %v1488 = vadd.f32 %v1487, 1e-05
        %v1489 = vrsqrt.pop %v1488
        %v1490 = vmul.f32 %v1489, %v1488
        %v1491 = vmul.f32 %v1490, %v1489
        %v1492 = vmul.f32 0.5, %v1491
        %v1493 = vsub.f32 1.5, %v1492
        %v1494 = vmul.f32 %v1489, %v1493
        %vm1495 = vweird.f32 %v1488
        %vm1496 = vweird.f32 %v1489
        %vm1497 = vmor %vm1495, %vm1496
        %v1498 = vsel %vm1497, %v1489, %v1494
        %v1499 = vmul.f32 %v1482, %v1498
        %v1501 = vperm.slane %v1475, 0
        %v1503 = vmul.f32 %v1499, %v1501
        %v1505 = vperm.slane %v1477, 0
        %v1507 = vadd.f32 %v1503, %v1505
        %v1508 = vpack.c.bf16 %v1507, %v1507
        %s1509 = scalar_lea.vmem %s3, 16
        %v1510 = vld [vmem:[%s1509] sm:$0xf]
        %v1511 = vld [vmem:[%s1509 + $0x4] sm:$0xf]
        %v1512 = vld [vmem:[%s1509 + $0x8] sm:$0xf]
        %v1513 = vld [vmem:[%s1509 + $0xc] sm:$0xf]
        %s1514 = scalar_lea.vmem %s4, 1
        %v1515 = vld [vmem:[%s1514] sm:$0x1]
        %v1517 = vperm.slane %v1515, 0
        %v1523 = vunpack.c.l.b16 %v1510
        %v1524 = vunpack.c.l.b16 %v1511
        %v1525 = vunpack.c.l.b16 %v1512
        %v1526 = vunpack.c.l.b16 %v1513
        %v1527 = vpack.c.b16 %v1524, %v1523
        %v1528 = vpack.c.b16 %v1526, %v1525
        %v1532 = vsel %vm494, %v1508, 0
        %1534 = vmatpush.bf16.msra.mxu0 0
        %1535 = vmatpush.bf16.msra.mxu0 0
        %1536 = vmatpush.bf16.msra.mxu0 0
        %1537 = vmatpush.bf16.msra.mxu0 0
        %1538 = vmatpush.bf16.msra.mxu0 0
        %1539 = vmatpush.bf16.msra.mxu0 0
        %1540 = vmatpush.bf16.msra.mxu0 %v1528
        %1541 = vmatpush.bf16.msra.mxu0 %v1527
        %1542 = vmatmul.bf16.gmra.mxu0 %v1532
        %v1543 = vpop.f32.mrf.mxu0
        %v1544 = vadd.f32 %v1517, %v1543
        %v1545 = vpop.f32.mrf.mxu0
        %1546 = vdwg.mxu0
        %1548 = vrot.lane.b32.xlu0 %v1544, 120
        %v1549 = vpop.permute.xlu0 %1548
        %1551 = vrot.lane.b32.xlu0 %v1544, 112
        %v1552 = vpop.permute.xlu0 %1551
        %1554 = vrot.lane.b32.xlu0 %v1544, 104
        %v1555 = vpop.permute.xlu0 %1554
        %v1557 = vrot.slane %v1552, 4
        %v1558 = vsel %vm580, %v1557, %v1544
        %v1559 = vrot.slane %v1544, 4
        %v1560 = vsel %vm580, %v1552, %v1559
        %v1562 = vunpack.c.l.s4 1983009808
        %v1563 = vunpack.c.0.s8 %v1562
        %v1564 = vperm.slane %v1558, %v1563
        %v1566 = vunpack.c.l.s4 1983009808
        %v1567 = vunpack.c.0.s8 %v1566
        %v1568 = vperm.slane %v1560, %v1567
        %v1569 = vrot.slane %v1555, 4
        %v1570 = vsel %vm580, %v1569, %v1549
        %v1571 = vrot.slane %v1549, 4
        %v1572 = vsel %vm580, %v1555, %v1571
        %v1574 = vunpack.c.l.s4 1983009808
        %v1575 = vunpack.c.0.s8 %v1574
        %v1576 = vperm.slane %v1570, %v1575
        %v1578 = vunpack.c.l.s4 1983009808
        %v1579 = vunpack.c.0.s8 %v1578
        %v1580 = vperm.slane %v1572, %v1579
        %v1581 = vrot.slane %v1576, 4
        %v1582 = vsel %vm580, %v1581, %v1564
        %v1583 = vrot.slane %v1564, 4
        %v1584 = vsel %vm580, %v1576, %v1583
        %v1586 = vunpack.c.l.s4 1934713408
        %v1587 = vunpack.c.0.s8 %v1586
        %v1588 = vperm.slane %v1582, %v1587
        %v1590 = vunpack.c.l.s4 1934713408
        %v1591 = vunpack.c.0.s8 %v1590
        %v1592 = vperm.slane %v1584, %v1591
        %v1593 = vrot.slane %v1580, 4
        %v1594 = vsel %vm580, %v1593, %v1568
        %v1595 = vrot.slane %v1568, 4
        %v1596 = vsel %vm580, %v1580, %v1595
        %v1598 = vunpack.c.l.s4 1934713408
        %v1599 = vunpack.c.0.s8 %v1598
        %v1600 = vperm.slane %v1594, %v1599
        %v1602 = vunpack.c.l.s4 1934713408
        %v1603 = vunpack.c.0.s8 %v1602
        %v1604 = vperm.slane %v1596, %v1603
        %v1605 = vrot.slane %v1588, 4
        %v1606 = vsel %vm580, 0.0, %v1605
        %v1607 = vrot.slane %v1592, 4
        %v1608 = vsel %vm580, 0.0, %v1607
        %v1609 = vrot.slane %v1600, 4
        %v1610 = vsel %vm580, 0.0, %v1609
        %v1611 = vrot.slane %v1604, 4
        %v1612 = vsel %vm580, 0.0, %v1611
        %v1613 = vsel %vm580, %v1607, %v1588
        %v1615 = vunpack.c.l.s4 1983009808
        %v1616 = vunpack.c.0.s8 %v1615
        %v1617 = vperm.slane %v1613, %v1616
        %v1618 = vrot.slane %v1608, 4
        %v1619 = vsel %vm580, %v1618, %v1606
        %v1621 = vunpack.c.l.s4 1983009808
        %v1622 = vunpack.c.0.s8 %v1621
        %v1623 = vperm.slane %v1619, %v1622
        %v1624 = vsel %vm580, %v1611, %v1600
        %v1626 = vunpack.c.l.s4 1983009808
        %v1627 = vunpack.c.0.s8 %v1626
        %v1628 = vperm.slane %v1624, %v1627
        %v1629 = vrot.slane %v1612, 4
        %v1630 = vsel %vm580, %v1629, %v1610
        %v1632 = vunpack.c.l.s4 1983009808
        %v1633 = vunpack.c.0.s8 %v1632
        %v1634 = vperm.slane %v1630, %v1633
        %v1635 = vrot.slane %v1623, 4
        %v1636 = vsel %vm580, %v1635, %v1617
        %v1637 = vrot.slane %v1617, 4
        %v1638 = vsel %vm580, %v1623, %v1637
        %v1640 = vunpack.c.l.s4 1934713408
        %v1641 = vunpack.c.0.s8 %v1640
        %v1642 = vperm.slane %v1636, %v1641
        %v1644 = vunpack.c.l.s4 1934713408
        %v1645 = vunpack.c.0.s8 %v1644
        %v1646 = vperm.slane %v1638, %v1645
        %v1647 = vrot.slane %v1634, 4
        %v1648 = vsel %vm580, %v1647, %v1628
        %v1649 = vrot.slane %v1628, 4
        %v1650 = vsel %vm580, %v1634, %v1649
        %v1652 = vunpack.c.l.s4 1934713408
        %v1653 = vunpack.c.0.s8 %v1652
        %v1654 = vperm.slane %v1648, %v1653
        %v1656 = vunpack.c.l.s4 1934713408
        %v1657 = vunpack.c.0.s8 %v1656
        %v1658 = vperm.slane %v1650, %v1657
        %v1659 = vrot.slane %v1654, 4
        %v1660 = vsel %vm580, %v1659, %v1642
        %v1661 = vrot.slane %v1642, 4
        %v1662 = vsel %vm580, %v1654, %v1661
        %v1663 = vrot.slane %v1658, 4
        %v1664 = vsel %vm580, %v1663, %v1646
        %v1665 = vrot.slane %v1646, 4
        %v1666 = vsel %vm580, %v1658, %v1665
        %1667 = vrot.lane.b32.xlu0 %v1544, 96
        %v1668 = vpop.permute.xlu0 %1667
        %1669 = vrot.lane.b32.xlu0 %v1549, 96
        %v1670 = vpop.permute.xlu0 %1669
        %1671 = vrot.lane.b32.xlu0 %v1552, 96
        %v1672 = vpop.permute.xlu0 %1671
        %1673 = vrot.lane.b32.xlu0 %v1555, 96
        %v1674 = vpop.permute.xlu0 %1673
        %v1679 = vrot.slane %v1672, 4
        %v1680 = vsel %vm580, %v1679, %v1668
        %v1681 = vrot.slane %v1668, 4
        %v1682 = vsel %vm580, %v1672, %v1681
        %v1684 = vunpack.c.l.s4 1983009808
        %v1685 = vunpack.c.0.s8 %v1684
        %v1686 = vperm.slane %v1680, %v1685
        %v1688 = vunpack.c.l.s4 1983009808
        %v1689 = vunpack.c.0.s8 %v1688
        %v1690 = vperm.slane %v1682, %v1689
        %v1691 = vrot.slane %v1674, 4
        %v1692 = vsel %vm580, %v1691, %v1670
        %v1693 = vrot.slane %v1670, 4
        %v1694 = vsel %vm580, %v1674, %v1693
        %v1696 = vunpack.c.l.s4 1983009808
        %v1697 = vunpack.c.0.s8 %v1696
        %v1698 = vperm.slane %v1692, %v1697
        %v1700 = vunpack.c.l.s4 1983009808
        %v1701 = vunpack.c.0.s8 %v1700
        %v1702 = vperm.slane %v1694, %v1701
        %v1703 = vrot.slane %v1698, 4
        %v1704 = vsel %vm580, %v1703, %v1686
        %v1705 = vrot.slane %v1686, 4
        %v1706 = vsel %vm580, %v1698, %v1705
        %v1708 = vunpack.c.l.s4 1934713408
        %v1709 = vunpack.c.0.s8 %v1708
        %v1710 = vperm.slane %v1704, %v1709
        %v1712 = vunpack.c.l.s4 1934713408
        %v1713 = vunpack.c.0.s8 %v1712
        %v1714 = vperm.slane %v1706, %v1713
        %v1715 = vrot.slane %v1702, 4
        %v1716 = vsel %vm580, %v1715, %v1690
        %v1717 = vrot.slane %v1690, 4
        %v1718 = vsel %vm580, %v1702, %v1717
        %v1720 = vunpack.c.l.s4 1934713408
        %v1721 = vunpack.c.0.s8 %v1720
        %v1722 = vperm.slane %v1716, %v1721
        %v1724 = vunpack.c.l.s4 1934713408
        %v1725 = vunpack.c.0.s8 %v1724
        %v1726 = vperm.slane %v1718, %v1725
        %v1727 = vrot.slane %v1710, 4
        %v1728 = vsel %vm580, 0.0, %v1727
        %v1729 = vrot.slane %v1714, 4
        %v1730 = vsel %vm580, 0.0, %v1729
        %v1731 = vrot.slane %v1722, 4
        %v1732 = vsel %vm580, 0.0, %v1731
        %v1733 = vrot.slane %v1726, 4
        %v1734 = vsel %vm580, 0.0, %v1733
        %v1735 = vsel %vm580, %v1729, %v1710
        %v1737 = vunpack.c.l.s4 1983009808
        %v1738 = vunpack.c.0.s8 %v1737
        %v1739 = vperm.slane %v1735, %v1738
        %v1740 = vrot.slane %v1730, 4
        %v1741 = vsel %vm580, %v1740, %v1728
        %v1743 = vunpack.c.l.s4 1983009808
        %v1744 = vunpack.c.0.s8 %v1743
        %v1745 = vperm.slane %v1741, %v1744
        %v1746 = vsel %vm580, %v1733, %v1722
        %v1748 = vunpack.c.l.s4 1983009808
        %v1749 = vunpack.c.0.s8 %v1748
        %v1750 = vperm.slane %v1746, %v1749
        %v1751 = vrot.slane %v1734, 4
        %v1752 = vsel %vm580, %v1751, %v1732
        %v1754 = vunpack.c.l.s4 1983009808
        %v1755 = vunpack.c.0.s8 %v1754
        %v1756 = vperm.slane %v1752, %v1755
        %v1757 = vrot.slane %v1745, 4
        %v1758 = vsel %vm580, %v1757, %v1739
        %v1759 = vrot.slane %v1739, 4
        %v1760 = vsel %vm580, %v1745, %v1759
        %v1762 = vunpack.c.l.s4 1934713408
        %v1763 = vunpack.c.0.s8 %v1762
        %v1764 = vperm.slane %v1758, %v1763
        %v1766 = vunpack.c.l.s4 1934713408
        %v1767 = vunpack.c.0.s8 %v1766
        %v1768 = vperm.slane %v1760, %v1767
        %v1769 = vrot.slane %v1756, 4
        %v1770 = vsel %vm580, %v1769, %v1750
        %v1771 = vrot.slane %v1750, 4
        %v1772 = vsel %vm580, %v1756, %v1771
        %v1774 = vunpack.c.l.s4 1934713408
        %v1775 = vunpack.c.0.s8 %v1774
        %v1776 = vperm.slane %v1770, %v1775
        %v1778 = vunpack.c.l.s4 1934713408
        %v1779 = vunpack.c.0.s8 %v1778
        %v1780 = vperm.slane %v1772, %v1779
        %v1781 = vrot.slane %v1776, 4
        %v1782 = vsel %vm580, %v1781, %v1764
        %v1783 = vrot.slane %v1764, 4
        %v1784 = vsel %vm580, %v1776, %v1783
        %v1785 = vrot.slane %v1780, 4
        %v1786 = vsel %vm580, %v1785, %v1768
        %v1787 = vrot.slane %v1768, 4
        %v1788 = vsel %vm580, %v1780, %v1787
        %1789 = vrot.lane.b32.xlu0 %v1544, 64
        %v1790 = vpop.permute.xlu0 %1789
        %1791 = vrot.lane.b32.xlu0 %v1549, 64
        %v1792 = vpop.permute.xlu0 %1791
        %1793 = vrot.lane.b32.xlu0 %v1552, 64
        %v1794 = vpop.permute.xlu0 %1793
        %1795 = vrot.lane.b32.xlu0 %v1555, 64
        %v1796 = vpop.permute.xlu0 %1795
        %v1801 = vrot.slane %v1794, 4
        %v1802 = vsel %vm580, %v1801, %v1790
        %v1803 = vrot.slane %v1790, 4
        %v1804 = vsel %vm580, %v1794, %v1803
        %v1806 = vunpack.c.l.s4 1983009808
        %v1807 = vunpack.c.0.s8 %v1806
        %v1808 = vperm.slane %v1802, %v1807
        %v1810 = vunpack.c.l.s4 1983009808
        %v1811 = vunpack.c.0.s8 %v1810
        %v1812 = vperm.slane %v1804, %v1811
        %v1813 = vrot.slane %v1796, 4
        %v1814 = vsel %vm580, %v1813, %v1792
        %v1815 = vrot.slane %v1792, 4
        %v1816 = vsel %vm580, %v1796, %v1815
        %v1818 = vunpack.c.l.s4 1983009808
        %v1819 = vunpack.c.0.s8 %v1818
        %v1820 = vperm.slane %v1814, %v1819
        %v1822 = vunpack.c.l.s4 1983009808
        %v1823 = vunpack.c.0.s8 %v1822
        %v1824 = vperm.slane %v1816, %v1823
        %v1825 = vrot.slane %v1820, 4
        %v1826 = vsel %vm580, %v1825, %v1808
        %v1827 = vrot.slane %v1808, 4
        %v1828 = vsel %vm580, %v1820, %v1827
        %v1830 = vunpack.c.l.s4 1934713408
        %v1831 = vunpack.c.0.s8 %v1830
        %v1832 = vperm.slane %v1826, %v1831
        %v1834 = vunpack.c.l.s4 1934713408
        %v1835 = vunpack.c.0.s8 %v1834
        %v1836 = vperm.slane %v1828, %v1835
        %v1837 = vrot.slane %v1824, 4
        %v1838 = vsel %vm580, %v1837, %v1812
        %v1839 = vrot.slane %v1812, 4
        %v1840 = vsel %vm580, %v1824, %v1839
        %v1842 = vunpack.c.l.s4 1934713408
        %v1843 = vunpack.c.0.s8 %v1842
        %v1844 = vperm.slane %v1838, %v1843
        %v1846 = vunpack.c.l.s4 1934713408
        %v1847 = vunpack.c.0.s8 %v1846
        %v1848 = vperm.slane %v1840, %v1847
        %v1849 = vrot.slane %v1832, 4
        %v1850 = vsel %vm580, 0.0, %v1849
        %v1851 = vrot.slane %v1836, 4
        %v1852 = vsel %vm580, 0.0, %v1851
        %v1853 = vrot.slane %v1844, 4
        %v1854 = vsel %vm580, 0.0, %v1853
        %v1855 = vrot.slane %v1848, 4
        %v1856 = vsel %vm580, 0.0, %v1855
        %v1857 = vsel %vm580, %v1851, %v1832
        %v1859 = vunpack.c.l.s4 1983009808
        %v1860 = vunpack.c.0.s8 %v1859
        %v1861 = vperm.slane %v1857, %v1860
        %v1862 = vrot.slane %v1852, 4
        %v1863 = vsel %vm580, %v1862, %v1850
        %v1865 = vunpack.c.l.s4 1983009808
        %v1866 = vunpack.c.0.s8 %v1865
        %v1867 = vperm.slane %v1863, %v1866
        %v1868 = vsel %vm580, %v1855, %v1844
        %v1870 = vunpack.c.l.s4 1983009808
        %v1871 = vunpack.c.0.s8 %v1870
        %v1872 = vperm.slane %v1868, %v1871
        %v1873 = vrot.slane %v1856, 4
        %v1874 = vsel %vm580, %v1873, %v1854
        %v1876 = vunpack.c.l.s4 1983009808
        %v1877 = vunpack.c.0.s8 %v1876
        %v1878 = vperm.slane %v1874, %v1877
        %v1879 = vrot.slane %v1867, 4
        %v1880 = vsel %vm580, %v1879, %v1861
        %v1881 = vrot.slane %v1861, 4
        %v1882 = vsel %vm580, %v1867, %v1881
        %v1884 = vunpack.c.l.s4 1934713408
        %v1885 = vunpack.c.0.s8 %v1884
        %v1886 = vperm.slane %v1880, %v1885
        %v1888 = vunpack.c.l.s4 1934713408
        %v1889 = vunpack.c.0.s8 %v1888
        %v1890 = vperm.slane %v1882, %v1889
        %v1891 = vrot.slane %v1878, 4
        %v1892 = vsel %vm580, %v1891, %v1872
        %v1893 = vrot.slane %v1872, 4
        %v1894 = vsel %vm580, %v1878, %v1893
        %v1896 = vunpack.c.l.s4 1934713408
        %v1897 = vunpack.c.0.s8 %v1896
        %v1898 = vperm.slane %v1892, %v1897
        %v1900 = vunpack.c.l.s4 1934713408
        %v1901 = vunpack.c.0.s8 %v1900
        %v1902 = vperm.slane %v1894, %v1901
        %v1903 = vrot.slane %v1898, 4
        %v1904 = vsel %vm580, %v1903, %v1886
        %v1905 = vrot.slane %v1886, 4
        %v1906 = vsel %vm580, %v1898, %v1905
        %v1907 = vrot.slane %v1902, 4
        %v1908 = vsel %vm580, %v1907, %v1890
        %v1909 = vrot.slane %v1890, 4
        %v1910 = vsel %vm580, %v1902, %v1909
        %v1911 = vpack.c.bf16 %v1660, %v1660
        %v1912 = vpack.c.bf16 %v1662, %v1662
        %v1913 = vpack.c.bf16 %v1664, %v1664
        %v1914 = vpack.c.bf16 %v1666, %v1666
        %v1915 = vpack.c.bf16 %v1782, %v1782
        %v1916 = vpack.c.bf16 %v1784, %v1784
        %v1917 = vpack.c.bf16 %v1786, %v1786
        %v1918 = vpack.c.bf16 %v1788, %v1788
        %v1920 = vsel %vm942, %v1911, 0
        %v1923 = vsel %vm942, %v1915, 0
        %1925 = vmatpush.bf16.xpose.msra.mxu0 0
        %1926 = vmatpush.bf16.xpose.msra.mxu0 0
        %1927 = vmatpush.bf16.xpose.msra.mxu0 0
        %1928 = vmatpush.bf16.xpose.msra.mxu0 0
        %1929 = vmatpush.bf16.xpose.msra.mxu0 0
        %1930 = vmatpush.bf16.xpose.msra.mxu0 0
        %1931 = vmatpush.bf16.xpose.msra.mxu0 0
        %1932 = vmatpush.bf16.xpose.msra.mxu0 %v1923
        %1933 = vmatmul.bf16.gmra.mxu0 %v1920
        %v1934 = vpop.f32.mrf.mxu0
        %v1935 = vadd.f32 0.0, %v1934
        %v1936 = vpop.f32.mrf.mxu0
        %1937 = vdwg.mxu0
        %v1939 = vsel %vm942, %v1912, 0
        %v1942 = vsel %vm942, %v1916, 0
        %1944 = vmatpush.bf16.xpose.msra.mxu0 0
        %1945 = vmatpush.bf16.xpose.msra.mxu0 0
        %1946 = vmatpush.bf16.xpose.msra.mxu0 0
        %1947 = vmatpush.bf16.xpose.msra.mxu0 0
        %1948 = vmatpush.bf16.xpose.msra.mxu0 0
        %1949 = vmatpush.bf16.xpose.msra.mxu0 0
        %1950 = vmatpush.bf16.xpose.msra.mxu0 0
        %1951 = vmatpush.bf16.xpose.msra.mxu0 %v1942
        %1952 = vmatmul.bf16.gmra.mxu0 %v1939
        %v1953 = vpop.f32.mrf.mxu0
        %v1954 = vadd.f32 0.0, %v1953
        %v1955 = vpop.f32.mrf.mxu0
        %1956 = vdwg.mxu0
        %v1958 = vsel %vm942, %v1913, 0
        %v1961 = vsel %vm942, %v1917, 0
        %1963 = vmatpush.bf16.xpose.msra.mxu0 0
        %1964 = vmatpush.bf16.xpose.msra.mxu0 0
        %1965 = vmatpush.bf16.xpose.msra.mxu0 0
        %1966 = vmatpush.bf16.xpose.msra.mxu0 0
        %1967 = vmatpush.bf16.xpose.msra.mxu0 0
        %1968 = vmatpush.bf16.xpose.msra.mxu0 0
        %1969 = vmatpush.bf16.xpose.msra.mxu0 0
        %1970 = vmatpush.bf16.xpose.msra.mxu0 %v1961
        %1971 = vmatmul.bf16.gmra.mxu0 %v1958
        %v1972 = vpop.f32.mrf.mxu0
        %v1973 = vadd.f32 0.0, %v1972
        %v1974 = vpop.f32.mrf.mxu0
        %1975 = vdwg.mxu0
        %v1977 = vsel %vm942, %v1914, 0
        %v1980 = vsel %vm942, %v1918, 0
        %1982 = vmatpush.bf16.xpose.msra.mxu0 0
        %1983 = vmatpush.bf16.xpose.msra.mxu0 0
        %1984 = vmatpush.bf16.xpose.msra.mxu0 0
        %1985 = vmatpush.bf16.xpose.msra.mxu0 0
        %1986 = vmatpush.bf16.xpose.msra.mxu0 0
        %1987 = vmatpush.bf16.xpose.msra.mxu0 0
        %1988 = vmatpush.bf16.xpose.msra.mxu0 0
        %1989 = vmatpush.bf16.xpose.msra.mxu0 %v1980
        %1990 = vmatmul.bf16.gmra.mxu0 %v1977
        %v1991 = vpop.f32.mrf.mxu0
        %v1992 = vadd.f32 0.0, %v1991
        %v1993 = vpop.f32.mrf.mxu0
        %1994 = vdwg.mxu0
        %v1995 = vsel %vm942, %v1935, -inf
        %1996 = vmax.xlane.f32.xlu0 %v1995
        %v1997 = vpop.xlane.xlu0 %1996
        %v1998 = vsel %vm942, %v1954, -inf
        %1999 = vmax.xlane.f32.xlu0 %v1998
        %v2000 = vpop.xlane.xlu0 %1999
        %v2001 = vsel %vm942, %v1973, -inf
        %2002 = vmax.xlane.f32.xlu0 %v2001
        %v2003 = vpop.xlane.xlu0 %2002
        %v2004 = vsel %vm942, %v1992, -inf
        %2005 = vmax.xlane.f32.xlu0 %v2004
        %v2006 = vpop.xlane.xlu0 %2005
        %v2007 = vsub.f32 %v1935, %v1997
        %v2008 = vsub.f32 %v1954, %v2000
        %v2009 = vsub.f32 %v1973, %v2003
        %v2010 = vsub.f32 %v1992, %v2006
        %v2011 = vmul.f32 %v2007, 1.442695
        %v2012 = vpow.pop %v2011
        %v2013 = vmul.f32 %v2008, 1.442695
        %v2014 = vpow.pop %v2013
        %v2015 = vmul.f32 %v2009, 1.442695
        %v2016 = vpow.pop %v2015
        %v2017 = vmul.f32 %v2010, 1.442695
        %v2018 = vpow.pop %v2017
        %v2019 = vsel %vm942, %v2012, 0.0
        %2020 = vadd.xlane.f32.xlu0 %v2019
        %v2021 = vpop.xlane.xlu0 %2020
        %v2022 = vsel %vm942, %v2014, 0.0
        %2023 = vadd.xlane.f32.xlu0 %v2022
        %v2024 = vpop.xlane.xlu0 %2023
        %v2025 = vsel %vm942, %v2016, 0.0
        %2026 = vadd.xlane.f32.xlu0 %v2025
        %v2027 = vpop.xlane.xlu0 %2026
        %v2028 = vsel %vm942, %v2018, 0.0
        %2029 = vadd.xlane.f32.xlu0 %v2028
        %v2030 = vpop.xlane.xlu0 %2029
        %v2031 = vrcp.pop %v2021
        %v2032 = vrcp.pop %v2024
        %v2033 = vrcp.pop %v2027
        %v2034 = vrcp.pop %v2030
        %v2035 = vmul.f32 %v2012, %v2031
        %v2036 = vmul.f32 %v2014, %v2032
        %v2037 = vmul.f32 %v2016, %v2033
        %v2038 = vmul.f32 %v2018, %v2034
        %v2039 = vpack.c.bf16 %v2035, %v2035
        %v2040 = vpack.c.bf16 %v2036, %v2036
        %v2041 = vpack.c.bf16 %v2037, %v2037
        %v2042 = vpack.c.bf16 %v2038, %v2038
        %v2043 = vpack.c.bf16 %v1904, %v1904
        %v2044 = vpack.c.bf16 %v1906, %v1906
        %v2045 = vpack.c.bf16 %v1908, %v1908
        %v2046 = vpack.c.bf16 %v1910, %v1910
        %v2048 = vsel %vm942, %v2039, 0
        %v2051 = vsel %vm1074, %v2043, 0
        %2053 = vmatpush.bf16.msra.mxu0 0
        %2054 = vmatpush.bf16.msra.mxu0 0
        %2055 = vmatpush.bf16.msra.mxu0 0
        %2056 = vmatpush.bf16.msra.mxu0 0
        %2057 = vmatpush.bf16.msra.mxu0 0
        %2058 = vmatpush.bf16.msra.mxu0 0
        %2059 = vmatpush.bf16.msra.mxu0 0
        %2060 = vmatpush.bf16.msra.mxu0 %v2051
        %2061 = vmatmul.bf16.gmra.mxu0 %v2048
        %v2062 = vpop.f32.mrf.mxu0
        %v2063 = vadd.f32 0.0, %v2062
        %v2064 = vpop.f32.mrf.mxu0
        %2065 = vdwg.mxu0
        %v2067 = vsel %vm942, %v2040, 0
        %v2070 = vsel %vm1074, %v2044, 0
        %2072 = vmatpush.bf16.msra.mxu0 0
        %2073 = vmatpush.bf16.msra.mxu0 0
        %2074 = vmatpush.bf16.msra.mxu0 0
        %2075 = vmatpush.bf16.msra.mxu0 0
        %2076 = vmatpush.bf16.msra.mxu0 0
        %2077 = vmatpush.bf16.msra.mxu0 0
        %2078 = vmatpush.bf16.msra.mxu0 0
        %2079 = vmatpush.bf16.msra.mxu0 %v2070
        %2080 = vmatmul.bf16.gmra.mxu0 %v2067
        %v2081 = vpop.f32.mrf.mxu0
        %v2082 = vadd.f32 0.0, %v2081
        %v2083 = vpop.f32.mrf.mxu0
        %2084 = vdwg.mxu0
        %v2086 = vsel %vm942, %v2041, 0
        %v2089 = vsel %vm1074, %v2045, 0
        %2091 = vmatpush.bf16.msra.mxu0 0
        %2092 = vmatpush.bf16.msra.mxu0 0
        %2093 = vmatpush.bf16.msra.mxu0 0
        %2094 = vmatpush.bf16.msra.mxu0 0
        %2095 = vmatpush.bf16.msra.mxu0 0
        %2096 = vmatpush.bf16.msra.mxu0 0
        %2097 = vmatpush.bf16.msra.mxu0 0
        %2098 = vmatpush.bf16.msra.mxu0 %v2089
        %2099 = vmatmul.bf16.gmra.mxu0 %v2086
        %v2100 = vpop.f32.mrf.mxu0
        %v2101 = vadd.f32 0.0, %v2100
        %v2102 = vpop.f32.mrf.mxu0
        %2103 = vdwg.mxu0
        %v2105 = vsel %vm942, %v2042, 0
        %v2108 = vsel %vm1074, %v2046, 0
        %2110 = vmatpush.bf16.msra.mxu0 0
        %2111 = vmatpush.bf16.msra.mxu0 0
        %2112 = vmatpush.bf16.msra.mxu0 0
        %2113 = vmatpush.bf16.msra.mxu0 0
        %2114 = vmatpush.bf16.msra.mxu0 0
        %2115 = vmatpush.bf16.msra.mxu0 0
        %2116 = vmatpush.bf16.msra.mxu0 0
        %2117 = vmatpush.bf16.msra.mxu0 %v2108
        %2118 = vmatmul.bf16.gmra.mxu0 %v2105
        %v2119 = vpop.f32.mrf.mxu0
        %v2120 = vadd.f32 0.0, %v2119
        %v2121 = vpop.f32.mrf.mxu0
        %2122 = vdwg.mxu0
        %v2123 = vrot.slane %v2101, 4
        %v2124 = vsel %vm580, %v2123, %v2063
        %v2125 = vrot.slane %v2063, 4
        %v2126 = vsel %vm580, %v2101, %v2125
        %v2128 = vunpack.c.l.s4 1983009808
        %v2129 = vunpack.c.0.s8 %v2128
        %v2130 = vperm.slane %v2124, %v2129
        %v2132 = vunpack.c.l.s4 1983009808
        %v2133 = vunpack.c.0.s8 %v2132
        %v2134 = vperm.slane %v2126, %v2133
        %v2135 = vrot.slane %v2120, 4
        %v2136 = vsel %vm580, %v2135, %v2082
        %v2137 = vrot.slane %v2082, 4
        %v2138 = vsel %vm580, %v2120, %v2137
        %v2140 = vunpack.c.l.s4 1983009808
        %v2141 = vunpack.c.0.s8 %v2140
        %v2142 = vperm.slane %v2136, %v2141
        %v2144 = vunpack.c.l.s4 1983009808
        %v2145 = vunpack.c.0.s8 %v2144
        %v2146 = vperm.slane %v2138, %v2145
        %v2147 = vrot.slane %v2142, 4
        %v2148 = vsel %vm580, %v2147, %v2130
        %v2149 = vrot.slane %v2130, 4
        %v2150 = vsel %vm580, %v2142, %v2149
        %v2152 = vunpack.c.l.s4 1934713408
        %v2153 = vunpack.c.0.s8 %v2152
        %v2154 = vperm.slane %v2148, %v2153
        %v2156 = vunpack.c.l.s4 1934713408
        %v2157 = vunpack.c.0.s8 %v2156
        %v2158 = vperm.slane %v2150, %v2157
        %v2159 = vrot.slane %v2146, 4
        %v2160 = vsel %vm580, %v2159, %v2134
        %v2161 = vrot.slane %v2134, 4
        %v2162 = vsel %vm580, %v2146, %v2161
        %v2164 = vunpack.c.l.s4 1934713408
        %v2165 = vunpack.c.0.s8 %v2164
        %v2166 = vperm.slane %v2160, %v2165
        %v2168 = vunpack.c.l.s4 1934713408
        %v2169 = vunpack.c.0.s8 %v2168
        %v2170 = vperm.slane %v2162, %v2169
        %v2171 = vrot.slane %v2154, 4
        %v2172 = vsel %vm580, 0.0, %v2171
        %v2173 = vrot.slane %v2158, 4
        %v2174 = vsel %vm580, 0.0, %v2173
        %v2175 = vrot.slane %v2166, 4
        %v2176 = vsel %vm580, 0.0, %v2175
        %v2177 = vrot.slane %v2170, 4
        %v2178 = vsel %vm580, 0.0, %v2177
        %v2179 = vsel %vm580, %v2173, %v2154
        %v2181 = vunpack.c.l.s4 1983009808
        %v2182 = vunpack.c.0.s8 %v2181
        %v2183 = vperm.slane %v2179, %v2182
        %v2184 = vrot.slane %v2174, 4
        %v2185 = vsel %vm580, %v2184, %v2172
        %v2187 = vunpack.c.l.s4 1983009808
        %v2188 = vunpack.c.0.s8 %v2187
        %v2189 = vperm.slane %v2185, %v2188
        %v2190 = vsel %vm580, %v2177, %v2166
        %v2192 = vunpack.c.l.s4 1983009808
        %v2193 = vunpack.c.0.s8 %v2192
        %v2194 = vperm.slane %v2190, %v2193
        %v2195 = vrot.slane %v2178, 4
        %v2196 = vsel %vm580, %v2195, %v2176
        %v2198 = vunpack.c.l.s4 1983009808
        %v2199 = vunpack.c.0.s8 %v2198
        %v2200 = vperm.slane %v2196, %v2199
        %v2201 = vrot.slane %v2189, 4
        %v2202 = vsel %vm580, %v2201, %v2183
        %v2203 = vrot.slane %v2183, 4
        %v2204 = vsel %vm580, %v2189, %v2203
        %v2206 = vunpack.c.l.s4 1934713408
        %v2207 = vunpack.c.0.s8 %v2206
        %v2208 = vperm.slane %v2202, %v2207
        %v2210 = vunpack.c.l.s4 1934713408
        %v2211 = vunpack.c.0.s8 %v2210
        %v2212 = vperm.slane %v2204, %v2211
        %v2213 = vrot.slane %v2200, 4
        %v2214 = vsel %vm580, %v2213, %v2194
        %v2215 = vrot.slane %v2194, 4
        %v2216 = vsel %vm580, %v2200, %v2215
        %v2218 = vunpack.c.l.s4 1934713408
        %v2219 = vunpack.c.0.s8 %v2218
        %v2220 = vperm.slane %v2214, %v2219
        %v2222 = vunpack.c.l.s4 1934713408
        %v2223 = vunpack.c.0.s8 %v2222
        %v2224 = vperm.slane %v2216, %v2223
        %v2225 = vrot.slane %v2220, 4
        %v2226 = vsel %vm580, %v2225, %v2208
        %v2227 = vrot.slane %v2208, 4
        %v2228 = vsel %vm580, %v2220, %v2227
        %v2229 = vrot.slane %v2224, 4
        %v2230 = vsel %vm580, %v2229, %v2212
        %v2231 = vrot.slane %v2212, 4
        %v2232 = vsel %vm580, %v2224, %v2231
        %2234 = vrot.lane.b32.xlu0 %v2228, 8
        %v2235 = vpop.permute.xlu0 %2234
        %2238 = vrot.lane.b32.xlu0 %v2230, 16
        %v2239 = vpop.permute.xlu0 %2238
        %2242 = vrot.lane.b32.xlu0 %v2232, 24
        %v2243 = vpop.permute.xlu0 %2242
        %v2245 = vsel %vm942, %v2226, %v2235
        %v2246 = vsel %vm1271, %v2245, %v2239
        %v2247 = vsel %vm1273, %v2246, %v2243
        %v2248 = vpack.c.bf16 %v2247, %v2247
        %s2249 = scalar_lea.vmem %s5, 16
        %v2250 = vld [vmem:[%s2249] sm:$0xf]
        %v2251 = vld [vmem:[%s2249 + $0x4] sm:$0xf]
        %v2252 = vld [vmem:[%s2249 + $0x8] sm:$0xf]
        %v2253 = vld [vmem:[%s2249 + $0xc] sm:$0xf]
        %s2254 = scalar_lea.vmem %s6, 1
        %v2255 = vld [vmem:[%s2254] sm:$0x1]
        %v2257 = vperm.slane %v2255, 0
        %v2263 = vunpack.c.l.b16 %v2250
        %v2264 = vunpack.c.l.b16 %v2251
        %v2265 = vunpack.c.l.b16 %v2252
        %v2266 = vunpack.c.l.b16 %v2253
        %v2267 = vpack.c.b16 %v2264, %v2263
        %v2268 = vpack.c.b16 %v2266, %v2265
        %v2272 = vsel %vm494, %v2248, 0
        %2274 = vmatpush.bf16.msra.mxu0 0
        %2275 = vmatpush.bf16.msra.mxu0 0
        %2276 = vmatpush.bf16.msra.mxu0 0
        %2277 = vmatpush.bf16.msra.mxu0 0
        %2278 = vmatpush.bf16.msra.mxu0 0
        %2279 = vmatpush.bf16.msra.mxu0 0
        %2280 = vmatpush.bf16.msra.mxu0 %v2268
        %2281 = vmatpush.bf16.msra.mxu0 %v2267
        %2282 = vmatmul.bf16.gmra.mxu0 %v2272
        %v2283 = vpop.f32.mrf.mxu0
        %v2284 = vadd.f32 %v2257, %v2283
        %v2285 = vpop.f32.mrf.mxu0
        %2286 = vdwg.mxu0
        %v2287 = vadd.f32 %v1473, %v2284
        %s2288 = scalar_lea.vmem %s7, 1
        %v2289 = vld [vmem:[%s2288] sm:$0x1]
        %s2290 = scalar_lea.vmem %s8, 1
        %v2291 = vld [vmem:[%s2290] sm:$0x1]
        %v2292 = vsel %vm494, %v2287, 0.0
        %2293 = vadd.xlane.f32.xlu0 %v2292
        %v2294 = vpop.xlane.xlu0 %2293
        %v2295 = vmul.f32 %v2294, %v504
        %v2296 = vsub.f32 %v2287, %v2295
        %v2297 = vmul.f32 %v2296, %v2296
        %v2298 = vsel %vm494, %v2297, 0.0
        %2299 = vadd.xlane.f32.xlu0 %v2298
        %v2300 = vpop.xlane.xlu0 %2299
        %v2301 = vmul.f32 %v2300, %v504
        %v2302 = vadd.f32 %v2301, 1e-05
        %v2303 = vrsqrt.pop %v2302
        %v2304 = vmul.f32 %v2303, %v2302
        %v2305 = vmul.f32 %v2304, %v2303
        %v2306 = vmul.f32 0.5, %v2305
        %v2307 = vsub.f32 1.5, %v2306
        %v2308 = vmul.f32 %v2303, %v2307
        %vm2309 = vweird.f32 %v2302
        %vm2310 = vweird.f32 %v2303
        %vm2311 = vmor %vm2309, %vm2310
        %v2312 = vsel %vm2311, %v2303, %v2308
        %v2313 = vmul.f32 %v2296, %v2312
        %v2315 = vperm.slane %v2289, 0
        %v2317 = vmul.f32 %v2313, %v2315
        %v2319 = vperm.slane %v2291, 0
        %v2321 = vadd.f32 %v2317, %v2319
        %v2322 = vpack.c.bf16 %v2321, %v2321
        %s2323 = scalar_lea.vmem %s9, 16
        %v2324 = vld [vmem:[%s2323] sm:$0xf]
        %v2325 = vld [vmem:[%s2323 + $0x4] sm:$0xf]
        %v2326 = vld [vmem:[%s2323 + $0x8] sm:$0xf]
        %v2327 = vld [vmem:[%s2323 + $0xc] sm:$0xf]
        %s2328 = scalar_lea.vmem %s10, 1
        %v2329 = vld [vmem:[%s2328] sm:$0x1]
        %v2331 = vperm.slane %v2329, 0
        %v2337 = vunpack.c.l.b16 %v2324
        %v2338 = vunpack.c.l.b16 %v2325
        %v2339 = vunpack.c.l.b16 %v2326
        %v2340 = vunpack.c.l.b16 %v2327
        %v2341 = vpack.c.b16 %v2338, %v2337
        %v2342 = vpack.c.b16 %v2340, %v2339
        %v2346 = vsel %vm494, %v2322, 0
        %2348 = vmatpush.bf16.msra.mxu0 0
        %2349 = vmatpush.bf16.msra.mxu0 0
        %2350 = vmatpush.bf16.msra.mxu0 0
        %2351 = vmatpush.bf16.msra.mxu0 0
        %2352 = vmatpush.bf16.msra.mxu0 0
        %2353 = vmatpush.bf16.msra.mxu0 0
        %2354 = vmatpush.bf16.msra.mxu0 %v2342
        %2355 = vmatpush.bf16.msra.mxu0 %v2341
        %2356 = vmatmul.bf16.gmra.mxu0 %v2346
        %v2357 = vpop.f32.mrf.mxu0
        %v2358 = vadd.f32 %v2331, %v2357
        %v2359 = vpop.f32.mrf.mxu0
        %2360 = vdwg.mxu0
        %v2361 = vmul.f32 %v2358, %v2358
        %v2362 = vmul.f32 %v2358, %v2361
        %v2363 = vmul.f32 %v2362, 0.044715
        %v2364 = vadd.f32 %v2358, %v2363
        %v2365 = vmul.f32 %v2364, 0.7978846
        %v2366 = vtanh.pop %v2365
        %v2367 = vadd.f32 %v2366, 1.0
        %v2368 = vmul.f32 %v2367, 0.5
        %v2369 = vmul.f32 %v2358, %v2368
        %v2370 = vpack.c.bf16 %v2369, %v2369
        %s2371 = scalar_lea.vmem %s11, 64
        %v2372 = vld [vmem:[%s2371] sm:$0xf]
        %v2373 = vld [vmem:[%s2371 + $0x4] sm:$0xf]
        %v2374 = vld [vmem:[%s2371 + $0x8] sm:$0xf]
        %v2375 = vld [vmem:[%s2371 + $0xc] sm:$0xf]
        %v2376 = vld [vmem:[%s2371 + $0x10] sm:$0xf]
        %v2377 = vld [vmem:[%s2371 + $0x14] sm:$0xf]
        %v2378 = vld [vmem:[%s2371 + $0x18] sm:$0xf]
        %v2379 = vld [vmem:[%s2371 + $0x1c] sm:$0xf]
        %v2380 = vld [vmem:[%s2371 + $0x20] sm:$0xf]
        %v2381 = vld [vmem:[%s2371 + $0x24] sm:$0xf]
        %v2382 = vld [vmem:[%s2371 + $0x28] sm:$0xf]
        %v2383 = vld [vmem:[%s2371 + $0x2c] sm:$0xf]
        %v2384 = vld [vmem:[%s2371 + $0x30] sm:$0xf]
        %v2385 = vld [vmem:[%s2371 + $0x34] sm:$0xf]
        %v2386 = vld [vmem:[%s2371 + $0x38] sm:$0xf]
        %v2387 = vld [vmem:[%s2371 + $0x3c] sm:$0xf]
        %s2388 = scalar_lea.vmem %s12, 1
        %v2389 = vld [vmem:[%s2388] sm:$0x1]
        %v2391 = vperm.slane %v2389, 0
        %v2409 = vunpack.c.l.b16 %v2372
        %v2410 = vunpack.c.l.b16 %v2373
        %v2411 = vunpack.c.l.b16 %v2374
        %v2412 = vunpack.c.l.b16 %v2375
        %v2413 = vunpack.c.l.b16 %v2376
        %v2414 = vunpack.c.l.b16 %v2377
        %v2415 = vunpack.c.l.b16 %v2378
        %v2416 = vunpack.c.l.b16 %v2379
        %v2417 = vunpack.c.l.b16 %v2380
        %v2418 = vunpack.c.l.b16 %v2381
        %v2419 = vunpack.c.l.b16 %v2382
        %v2420 = vunpack.c.l.b16 %v2383
        %v2421 = vunpack.c.l.b16 %v2384
        %v2422 = vunpack.c.l.b16 %v2385
        %v2423 = vunpack.c.l.b16 %v2386
        %v2424 = vunpack.c.l.b16 %v2387
        %v2425 = vpack.c.b16 %v2410, %v2409
        %v2426 = vpack.c.b16 %v2412, %v2411
        %v2427 = vpack.c.b16 %v2414, %v2413
        %v2428 = vpack.c.b16 %v2416, %v2415
        %v2429 = vpack.c.b16 %v2418, %v2417
        %v2430 = vpack.c.b16 %v2420, %v2419
        %v2431 = vpack.c.b16 %v2422, %v2421
        %v2432 = vpack.c.b16 %v2424, %v2423
        %2441 = vmatpush.bf16.msra.mxu0 %v2432
        %2442 = vmatpush.bf16.msra.mxu0 %v2431
        %2443 = vmatpush.bf16.msra.mxu0 %v2430
        %2444 = vmatpush.bf16.msra.mxu0 %v2429
        %2445 = vmatpush.bf16.msra.mxu0 %v2428
        %2446 = vmatpush.bf16.msra.mxu0 %v2427
        %2447 = vmatpush.bf16.msra.mxu0 %v2426
        %2448 = vmatpush.bf16.msra.mxu0 %v2425
        %2449 = vmatmul.bf16.gmra.mxu0 %v2370
        %v2450 = vpop.f32.mrf.mxu0
        %v2451 = vadd.f32 %v2391, %v2450
        %v2452 = vpop.f32.mrf.mxu0
        %2453 = vdwg.mxu0
        %v2454 = vadd.f32 %v2287, %v2451
        %v2455 = vld [vmem:[%s13] sm:$0x1]
        %v2456 = vld [vmem:[%s14] sm:$0x1]
        %v2457 = vsel %vm494, %v2454, 0.0
        %2458 = vadd.xlane.f32.xlu0 %v2457
        %v2459 = vpop.xlane.xlu0 %2458
        %v2460 = vmul.f32 %v2459, %v504
        %v2461 = vsub.f32 %v2454, %v2460
        %v2462 = vmul.f32 %v2461, %v2461
        %v2463 = vsel %vm494, %v2462, 0.0
        %2464 = vadd.xlane.f32.xlu0 %v2463
        %v2465 = vpop.xlane.xlu0 %2464
        %v2466 = vmul.f32 %v2465, %v504
        %v2467 = vadd.f32 %v2466, 1e-05
        %v2468 = vrsqrt.pop %v2467
        %v2469 = vmul.f32 %v2468, %v2467
        %v2470 = vmul.f32 %v2469, %v2468
        %v2471 = vmul.f32 0.5, %v2470
        %v2472 = vsub.f32 1.5, %v2471
        %v2473 = vmul.f32 %v2468, %v2472
        %vm2474 = vweird.f32 %v2467
        %vm2475 = vweird.f32 %v2468
        %vm2476 = vmor %vm2474, %vm2475
        %v2477 = vsel %vm2476, %v2468, %v2473
        %v2478 = vmul.f32 %v2461, %v2477
        %v2480 = vperm.slane %v2455, 0
        %v2482 = vmul.f32 %v2478, %v2480
        %v2484 = vperm.slane %v2456, 0
        %v2486 = vadd.f32 %v2482, %v2484
        %2487 = vst.msk [vmem:[%s485] sm:$0xff] %vm494, %v2486
        %s2488 = sand.u32 %s357, 1
        %s2489 = scalar_lea.sflag [#allocation3], %s2488
        %s2490 = sand.u32 %s357, 1
        %s2491 = smul.addr %s2490, 8
        %s2492 = scalar_lea.vmem [#allocation2], %s2491
        // Predicated region
        $region81: #{esm_forward.1} parent=79 // pred_check
          %p2493 = pneg %p367
        $region82: #{esm_forward.1} parent=79 // pred_check_branch
          %2495 = sbr.rel (%p2493) target = $region84
        $region83: #{esm_forward.1} parent=79 // pred_region
          %2497 = vsyncadd %s2489, 0
          %s2498 = smul.addr %s29, 8
          %s2499 = scalar_lea.hbm %s15, %s2498
          %s2501 = sshll.u32 %s2492, 4
          %s2502 = int_to_ptr.vmem [resolvable:$true] %s2501
          %s2503 = sshll.u32 %s2499, 4
          %s2504 = int_to_ptr.hbm [resolvable:$true] %s2503
          %2506 = dma.vmem_to_hbm [thread:$0]  %s2502, 128, %s2504, %s2489
        $region84: #{esm_forward.1} parent=79 // pred_fallthru
          _
      $region80: #{esm_forward.1} parent=5 // pred_fallthru
        _
      %p2507 = scmp.le.s32.totalorder 2, %s24
      // Predicated region
      $region85: #{esm_forward.1} parent=5 // pred_check
        %p2508 = pneg %p2507
      $region86: #{esm_forward.1} parent=5 // pred_check_branch
        %2510 = sbr.rel (%p2508) target = $region88
      $region87: #{esm_forward.1} parent=5 // pred_region
        %s2511 = ssub.s32 %s24, 2
        // Predicated region
        $region89: #{esm_forward.1} parent=87 // pred_check
          %p2512 = pneg %p373
        $region90: #{esm_forward.1} parent=87 // pred_check_branch
          %2514 = sbr.rel (%p2512) target = $region92
        $region91: #{esm_forward.1} parent=87 // pred_region
          %s2515 = sand.u32 %s358, 1
          %s2516 = scalar_lea.sflag [#allocation3], %s2515
          %s2517 = sand.u32 %s358, 1
          %s2518 = smul.addr %s2517, 8
          %s2519 = scalar_lea.vmem [#allocation2], %s2518
          %2521 = dma.done %s2516, 128
        $region92: #{esm_forward.1} parent=87 // pred_fallthru
          _
      $region88: #{esm_forward.1} parent=5 // pred_fallthru
        _
    $region6: #{esm_forward.1} parent=1 // loop_footer
      %s28 = sadd.s32 1, %s24
    $region7: #{esm_forward.1} parent=1 // loop_footer_branch
      %23 = sbr.rel target = $region3
    $region8: #{esm_forward.1} parent=1 // loop_exit
      _
    %2522 = vsyncpa [#allocation3], 1
    %s2523 = scalar_lea.sflag [#allocation3], 1
    %2524 = vsyncpa %s2523, 1

</llo_original>
